<compile_context>
chip_gen: v7x
topology: tpu7x:2x2x1
jax: 0.10.0
libtpu: 0.0.40
codegen_flags: <defaults>
</compile_context>

<pallas_src>
import functools
import numpy as np
import jax
import jax.numpy as jnp
from jax.experimental import pallas as pl
from jax.experimental.pallas import tpu as pltpu


def _centered_dft_matrix(n: int) -> np.ndarray:
    """Matrix M with M @ v == fftshift(fft(ifftshift(v), norm='ortho'))."""
    eye = np.fft.ifftshift(np.eye(n), axes=0)
    f = np.fft.fft(eye, axis=0, norm="ortho")
    return np.fft.fftshift(f, axes=0)


@functools.lru_cache(maxsize=None)
def _dft_constants(h: int, w: int):
    """Forward centered-DFT constants as Gauss 3-mult combos (f32 device arrays).

    Only the FORWARD DFT rides along; the inverse transform is realized through
    conjugate symmetry, FtH(d) = conj(Ft(conj(d))).
    """
    FH = _centered_dft_matrix(h)          # applied from the left:  FH @ y
    FWT = _centered_dft_matrix(w).T       # applied from the right: y @ FWT
    consts = (
        FH.real,                          # Ar
        FH.real + FH.imag,                # Ar + Ai
        FH.imag - FH.real,                # Ai - Ar
        FWT.real,                         # Br
        FWT.imag,                         # Bi
        FWT.real + FWT.imag,              # Br + Bi
    )
    return tuple(jnp.asarray(c, jnp.float32) for c in consts)


def _vmem_capacity_bytes() -> int:
    """Per-core VMEM capacity (generation aware), conservative fallback on failure."""
    try:
        return int(pltpu.get_tpu_info().vmem_capacity_bytes)
    except Exception:
        return 64 * 1024 * 1024           # v7x-sized fallback: safe on every chip


def _choose_tiling(bc: int, h: int, w: int, vmem_capacity: int):
    """Images per grid step (TB) and step count, sized from real VMEM capacity.

    VMEM model (f32, lane/sublane padded): 4 input + 2 output image planes per
    image, double-buffered by the pipeline, plus resident DFT constants, mask and
    per-image loop temporaries.  Prefers >= 2 steps and an EVEN step count so the
    embarrassingly parallel grid splits cleanly across v7x's two TensorCores.
    """
    wp = -(-w // 128) * 128
    hp = -(-h // 8) * 8
    plane = hp * wp * 4
    hpl = -(-h // 128) * 128
    wps = -(-w // 8) * 8
    const = 2 * 4 * (3 * hp * hpl + 3 * wps * wp)     # 6 resident combos (x2 buffers)
    fixed = const + 2 * plane + 14 * plane            # mask + live loop temporaries
    budget = int(0.75 * vmem_capacity) - fixed
    per_image = 12 * plane                            # (4 in + 2 out) x double buffer
    cap = int(max(1, budget // per_image))
    cap = int(min(cap, bc, 16))

    if cap >= bc:
        steps = 2 if bc > 1 else 1
    else:
        steps = -(-bc // cap)
    if steps > 1 and steps % 2:
        steps += 1                                    # even split for v7x's 2 TCs
    tb = -(-bc // steps)
    return tb, steps


def _cdc_kernel(shared_mask,
                fhr_ref, shp_ref, shm_ref, fwtr_ref, fwti_ref, swp_ref,
                xr_ref, xi_ref, kr_ref, ki_ref, m_ref, mean_ref, std_ref,
                or_ref, oi_ref):
    """Hard k-space data consistency for TB images (one grid step).

    Per image, with plain 2-D matmuls on stationary constants (no broadcasts):
      y  = x * std + mean
      ks = Ft(y)                       centered orthonormal 2-D DFT (Gauss 3-mult)
      d  = ks + m * (k - ks)           hard data consistency
      x2 = FtH(d) = conj(Ft(conj(d)))  conjugate-symmetry inverse
      out = (x2 - mean) / (std + 1e-11)
    """
    f32 = jnp.float32
    tb = xr_ref.shape[0]

    # Resident DFT constants: their block index never changes across the grid.
    fhr = fhr_ref[...]
    shp = shp_ref[...]
    shm = shm_ref[...]
    fwtr = fwtr_ref[...]
    fwti = fwti_ref[...]
    swp = swp_ref[...]
    m_shared = m_ref[0] if shared_mask else None

    def dot(a, b):
        # DEFAULT precision: one bf16 MXU pass with f32 accumulation
        # (previously HIGH = 3 passes).  ~1e-3 relative error for the chained
        # orthonormal DFTs, well inside the module's numerical tolerance.
        return jnp.dot(a, b, precision=jax.lax.Precision.DEFAULT,
                       preferred_element_type=f32)

    def body(t, carry):
        mean = mean_ref[t]                     # (1, 1) -> broadcasts over (H, W)
        std = std_ref[t]
        inv = 1.0 / (std + f32(1e-11))
        # un-normalize (mean/std are real -> only the real plane shifts).
        yr = xr_ref[t] * std + mean
        yi = xi_ref[t] * std

        # forward centered ortho 2-D DFT: W-side then H-side, Gauss 3-mult each.
        u1 = dot(yr, swp)
        ur = u1 - dot(yr + yi, fwti)           # yr@Br - yi@Bi
        ui = u1 + dot(yi - yr, fwtr)           # yr@Bi + yi@Br
        t1 = dot(fhr, ur + ui)
        ksr = t1 - dot(shp, ui)                # Ar@ur - Ai@ui
        ksi = t1 + dot(shm, ur)                # Ar@ui + Ai@ur

        # hard data consistency: d = ks + m * (k - ks).
        mm = m_shared if shared_mask else m_ref[t]
        dr = ksr + mm * (kr_ref[t] - ksr)
        di = ksi + mm * (ki_ref[t] - ksi)

        # inverse via conjugate symmetry, signs folded into the Gauss combines:
        #   q = conj(d) @ FWT ; w = FH @ q ; x2 = conj(w)
        v1 = dot(dr, swp)
        vr = v1 - dot(dr - di, fwti)           # dr@Br + di@Bi
        vi = v1 - dot(dr + di, fwtr)           # dr@Bi - di@Br
        t2 = dot(fhr, vr + vi)
        wr = t2 - dot(shp, vi)                 # x2_r
        wi = t2 + dot(shm, vr)                 # -x2_i

        # re-normalize; the 1e-11j imaginary part of the reference denominator is
        # negligible against (std + 1e-11), so a real divide suffices.
        or_ref[t] = (wr - mean) * inv
        oi_ref[t] = wi * (-inv)
        return carry

    jax.lax.fori_loop(0, tb, body, 0)


def c_dc_forward(k, m, x, mean, std):
    """Pallas implementation of the data-consistency forward(k, m, x, mean, std)."""
    B, C, H, W = x.shape
    BC = B * C
    f32 = jnp.float32

    fh_r, sh_p, sh_m, fwt_r, fwt_i, sw_p = _dft_constants(H, W)

    capacity = _vmem_capacity_bytes()
    TB, steps = _choose_tiling(BC, H, W, capacity)
    BCP = TB * steps

    def plane(a):
        a = a.astype(f32).reshape(BC, H, W)
        if BCP != BC:
            a = jnp.pad(a, ((0, BCP - BC), (0, 0), (0, 0)))
        return a

    # Four separate plane inputs: no wrapper-side stack -> no extra HBM round trip.
    xr = plane(jnp.real(x))
    xi = plane(jnp.imag(x))
    kr = plane(jnp.real(k))
    ki = plane(jnp.imag(k))

    def scalars(a):
        a = jnp.broadcast_to(jnp.asarray(a, f32), (B, C, 1, 1)).reshape(BC, 1, 1)
        if BCP != BC:
            a = jnp.pad(a, ((0, BCP - BC), (0, 0), (0, 0)))
        return a

    mean_img = scalars(mean)
    std_img = scalars(std)

    m_arr = jnp.asarray(m, f32)
    shared_mask = (m_arr.size == H * W)    # one undersampling mask for every image
    if shared_mask:
        mask = m_arr.reshape(1, H, W)
        m_spec = pl.BlockSpec((1, H, W), lambda i: (0, 0, 0))
    else:
        mask = jnp.broadcast_to(m_arr, (B, C, H, W)).reshape(BC, H, W)
        if BCP != BC:
            mask = jnp.pad(mask, ((0, BCP - BC), (0, 0), (0, 0)))
        m_spec = pl.BlockSpec((TB, H, W), lambda i: (i, 0, 0))

    mat_h = pl.BlockSpec((H, H), lambda i: (0, 0))
    mat_w = pl.BlockSpec((W, W), lambda i: (0, 0))
    img_spec = pl.BlockSpec((TB, H, W), lambda i: (i, 0, 0))
    sc_spec = pl.BlockSpec((TB, 1, 1), lambda i: (i, 0, 0))

    # Generation-aware VMEM limit: ~85% of the physical per-core capacity.
    vmem_limit = int(min(max(int(0.85 * capacity), 32 * 2 ** 20), 128 * 2 ** 20))

    out_r, out_i = pl.pallas_call(
        functools.partial(_cdc_kernel, shared_mask),
        grid=(steps,),
        in_specs=[mat_h, mat_h, mat_h, mat_w, mat_w, mat_w,
                  img_spec, img_spec, img_spec, img_spec,
                  m_spec, sc_spec, sc_spec],
        out_specs=[img_spec, img_spec],
        out_shape=(jax.ShapeDtypeStruct((BCP, H, W), f32),
                   jax.ShapeDtypeStruct((BCP, H, W), f32)),
        compiler_params=pltpu.CompilerParams(
            dimension_semantics=("parallel",),
            vmem_limit_bytes=vmem_limit),
    )(fh_r, sh_p, sh_m, fwt_r, fwt_i, sw_p,
      xr, xi, kr, ki, mask, mean_img, std_img)

    out = out_r[:BC] + 1j * out_i[:BC]
    return out.reshape(B, C, H, W)


def _ref_forward(k, m, x, mean, std):
    """Pure-JAX reference (Ft/FtH = centered orthonormal 2D FFT, as in the repo)."""
    def Ft(a):
        return jnp.fft.fftshift(
            jnp.fft.fft2(jnp.fft.ifftshift(a, axes=(-2, -1)), norm="ortho"),
            axes=(-2, -1))

    def FtH(a):
        return jnp.fft.fftshift(
            jnp.fft.ifft2(jnp.fft.ifftshift(a, axes=(-2, -1)), norm="ortho"),
            axes=(-2, -1))

    ks = Ft(x * std + mean)
    xx = FtH((1 - m) * ks + m * k)
    return (xx - mean) / (std + 1e-11 + 1j * 1e-11)


if __name__ == "__main__":
    B, C, H, W = 2, 4, 16, 16
    key = jax.random.PRNGKey(0)
    k1, k2, k3, k4, k5, k6, k7 = jax.random.split(key, 7)

    x = (jax.random.normal(k1, (B, C, H, W), jnp.float32)
         + 1j * jax.random.normal(k2, (B, C, H, W), jnp.float32))
    k_meas = (jax.random.normal(k3, (B, C, H, W), jnp.float32)
              + 1j * jax.random.normal(k4, (B, C, H, W), jnp.float32))
    # Spatially shared undersampling mask (typical MRI case; exercises the
    # non-materialized resident-mask path).
    m = (jax.random.uniform(k5, (1, 1, H, W)) > 0.5).astype(jnp.float32)
    mean = 0.1 * jax.random.normal(k6, (B, 1, 1, 1), jnp.float32)
    std = 0.5 + jnp.abs(jax.random.normal(k7, (B, 1, 1, 1), jnp.float32))

    out = jax.block_until_ready(c_dc_forward(k_meas, m, x, mean, std))
    ref = jax.block_until_ready(_ref_forward(k_meas, m, x, mean, std))

    err = float(jnp.max(jnp.abs(out - ref)))
    scale = float(jnp.max(jnp.abs(ref)))
    assert out.shape == (B, C, H, W) and jnp.iscomplexobj(out)
    # Single-pass bf16 MXU (Precision.DEFAULT) over two chained orthonormal DFTs
    # gives ~1e-3 relative error; allow 2e-2 relative headroom.
    assert err < 2e-2 * (1.0 + scale), f"max abs err {err} (scale {scale})"
    print("KERNEL_OK")
</pallas_src>

<mosaic_0001>
module attributes {stable_mosaic.version = 11 : i64} {
  func.func @_cdc_kernel(%arg0: i32, %arg1: memref<16x16xf32, #tpu.memory_space<vmem>>, %arg2: memref<16x16xf32, #tpu.memory_space<vmem>>, %arg3: memref<16x16xf32, #tpu.memory_space<vmem>>, %arg4: memref<16x16xf32, #tpu.memory_space<vmem>>, %arg5: memref<16x16xf32, #tpu.memory_space<vmem>>, %arg6: memref<16x16xf32, #tpu.memory_space<vmem>>, %arg7: memref<4x16x16xf32, #tpu.memory_space<vmem>>, %arg8: memref<4x16x16xf32, #tpu.memory_space<vmem>>, %arg9: memref<4x16x16xf32, #tpu.memory_space<vmem>>, %arg10: memref<4x16x16xf32, #tpu.memory_space<vmem>>, %arg11: memref<1x16x16xf32, #tpu.memory_space<vmem>>, %arg12: memref<4x1x1xf32, #tpu.memory_space<vmem>>, %arg13: memref<4x1x1xf32, #tpu.memory_space<vmem>>, %arg14: memref<4x16x16xf32, #tpu.memory_space<vmem>>, %arg15: memref<4x16x16xf32, #tpu.memory_space<vmem>>) attributes {dimension_semantics = [#tpu.dimension_semantics<parallel>], iteration_bounds = array<i64: 2>, scalar_prefetch = 0 : i64, scratch_operands = 0 : i64, tpu.core_type = #tpu.core_type<tc>, window_params = [{pipeline_mode = #tpu.pipeline_mode<synchronous>, transform_indices = @transform_0, window_bounds = array<i64: 16, 16>}, {pipeline_mode = #tpu.pipeline_mode<synchronous>, transform_indices = @transform_1, window_bounds = array<i64: 16, 16>}, {pipeline_mode = #tpu.pipeline_mode<synchronous>, transform_indices = @transform_2, window_bounds = array<i64: 16, 16>}, {pipeline_mode = #tpu.pipeline_mode<synchronous>, transform_indices = @transform_3, window_bounds = array<i64: 16, 16>}, {pipeline_mode = #tpu.pipeline_mode<synchronous>, transform_indices = @transform_4, window_bounds = array<i64: 16, 16>}, {pipeline_mode = #tpu.pipeline_mode<synchronous>, transform_indices = @transform_5, window_bounds = array<i64: 16, 16>}, {transform_indices = @transform_6, window_bounds = array<i64: 4, 16, 16>}, {transform_indices = @transform_7, window_bounds = array<i64: 4, 16, 16>}, {transform_indices = @transform_8, window_bounds = array<i64: 4, 16, 16>}, {transform_indices = @transform_9, window_bounds = array<i64: 4, 16, 16>}, {pipeline_mode = #tpu.pipeline_mode<synchronous>, transform_indices = @transform_10, window_bounds = array<i64: 1, 16, 16>}, {transform_indices = @transform_11, window_bounds = array<i64: 4, 1, 1>}, {transform_indices = @transform_12, window_bounds = array<i64: 4, 1, 1>}, {transform_indices = @transform_13, window_bounds = array<i64: 4, 16, 16>}, {transform_indices = @transform_14, window_bounds = array<i64: 4, 16, 16>}]} {
    %c0 = arith.constant 0 : index
    %c0_0 = arith.constant 0 : index
    %0 = vector.load %arg1[%c0, %c0_0] : memref<16x16xf32, #tpu.memory_space<vmem>>, vector<16x16xf32>
    %c0_1 = arith.constant 0 : index
    %c0_2 = arith.constant 0 : index
    %1 = vector.load %arg2[%c0_1, %c0_2] : memref<16x16xf32, #tpu.memory_space<vmem>>, vector<16x16xf32>
    %c0_3 = arith.constant 0 : index
    %c0_4 = arith.constant 0 : index
    %2 = vector.load %arg3[%c0_3, %c0_4] : memref<16x16xf32, #tpu.memory_space<vmem>>, vector<16x16xf32>
    %c0_5 = arith.constant 0 : index
    %c0_6 = arith.constant 0 : index
    %3 = vector.load %arg4[%c0_5, %c0_6] : memref<16x16xf32, #tpu.memory_space<vmem>>, vector<16x16xf32>
    %c0_7 = arith.constant 0 : index
    %c0_8 = arith.constant 0 : index
    %4 = vector.load %arg5[%c0_7, %c0_8] : memref<16x16xf32, #tpu.memory_space<vmem>>, vector<16x16xf32>
    %c0_9 = arith.constant 0 : index
    %c0_10 = arith.constant 0 : index
    %5 = vector.load %arg6[%c0_9, %c0_10] : memref<16x16xf32, #tpu.memory_space<vmem>>, vector<16x16xf32>
    %c0_11 = arith.constant 0 : index
    %c0_12 = arith.constant 0 : index
    %c0_13 = arith.constant 0 : index
    %6 = vector.load %arg11[%c0_11, %c0_12, %c0_13] : memref<1x16x16xf32, #tpu.memory_space<vmem>>, vector<1x16x16xf32>
    %7 = vector.shape_cast %6 : vector<1x16x16xf32> to vector<16x16xf32>
    %c0_i32 = arith.constant 0 : i32
    %c4_i32 = arith.constant 4 : i32
    %8 = arith.addi %c0_i32, %c4_i32 : i32
    %c1_i32 = arith.constant 1 : i32
    scf.for %arg16 = %c0_i32 to %8 step %c1_i32  : i32 {
      %9 = arith.index_cast %arg16 : i32 to index
      %c0_15 = arith.constant 0 : index
      %c0_16 = arith.constant 0 : index
      %10 = vector.load %arg12[%9, %c0_15, %c0_16] : memref<4x1x1xf32, #tpu.memory_space<vmem>>, vector<1x1x1xf32>
      %11 = vector.shape_cast %10 : vector<1x1x1xf32> to vector<1x1xf32>
      %12 = arith.index_cast %arg16 : i32 to index
      %c0_17 = arith.constant 0 : index
      %c0_18 = arith.constant 0 : index
      %13 = vector.load %arg13[%12, %c0_17, %c0_18] : memref<4x1x1xf32, #tpu.memory_space<vmem>>, vector<1x1x1xf32>
      %14 = vector.shape_cast %13 : vector<1x1x1xf32> to vector<1x1xf32>
      %cst = arith.constant 9.99999996E-12 : f32
      %15 = vector.broadcast %cst : f32 to vector<1x1xf32>
      %16 = arith.addf %14, %15 : vector<1x1xf32>
      %cst_19 = arith.constant 1.000000e+00 : f32
      %17 = vector.broadcast %cst_19 : f32 to vector<1x1xf32>
      %18 = arith.divf %17, %16 : vector<1x1xf32>
      %19 = arith.index_cast %arg16 : i32 to index
      %c0_20 = arith.constant 0 : index
      %c0_21 = arith.constant 0 : index
      %20 = vector.load %arg7[%19, %c0_20, %c0_21] : memref<4x16x16xf32, #tpu.memory_space<vmem>>, vector<1x16x16xf32>
      %21 = vector.shape_cast %20 : vector<1x16x16xf32> to vector<16x16xf32>
      %22 = vector.broadcast %14 : vector<1x1xf32> to vector<16x16xf32>
      %23 = arith.mulf %21, %22 : vector<16x16xf32>
      %24 = vector.broadcast %11 : vector<1x1xf32> to vector<16x16xf32>
      %25 = arith.addf %23, %24 : vector<16x16xf32>
      %26 = arith.index_cast %arg16 : i32 to index
      %c0_22 = arith.constant 0 : index
      %c0_23 = arith.constant 0 : index
      %27 = vector.load %arg8[%26, %c0_22, %c0_23] : memref<4x16x16xf32, #tpu.memory_space<vmem>>, vector<1x16x16xf32>
      %28 = vector.shape_cast %27 : vector<1x16x16xf32> to vector<16x16xf32>
      %29 = vector.broadcast %14 : vector<1x1xf32> to vector<16x16xf32>
      %30 = arith.mulf %28, %29 : vector<16x16xf32>
      %cst_24 = arith.constant dense<0.000000e+00> : vector<16x16xf32>
      %31 = tpu.matmul %25, %5, %cst_24 {dimension_numbers = #tpu.dot_dimension_numbers<[1], [0], [0], [1], [0, 0, 1, 1], [], []>} : vector<16x16xf32>, vector<16x16xf32>, vector<16x16xf32> -> vector<16x16xf32>
      %32 = arith.addf %25, %30 : vector<16x16xf32>
      %cst_25 = arith.constant dense<0.000000e+00> : vector<16x16xf32>
      %33 = tpu.matmul %32, %4, %cst_25 {dimension_numbers = #tpu.dot_dimension_numbers<[1], [0], [0], [1], [0, 0, 1, 1], [], []>} : vector<16x16xf32>, vector<16x16xf32>, vector<16x16xf32> -> vector<16x16xf32>
      %34 = arith.subf %31, %33 : vector<16x16xf32>
      %35 = arith.subf %30, %25 : vector<16x16xf32>
      %cst_26 = arith.constant dense<0.000000e+00> : vector<16x16xf32>
      %36 = tpu.matmul %35, %3, %cst_26 {dimension_numbers = #tpu.dot_dimension_numbers<[1], [0], [0], [1], [0, 0, 1, 1], [], []>} : vector<16x16xf32>, vector<16x16xf32>, vector<16x16xf32> -> vector<16x16xf32>
      %37 = arith.addf %31, %36 : vector<16x16xf32>
      %38 = arith.addf %34, %37 : vector<16x16xf32>
      %cst_27 = arith.constant dense<0.000000e+00> : vector<16x16xf32>
      %39 = tpu.matmul %0, %38, %cst_27 {dimension_numbers = #tpu.dot_dimension_numbers<[1], [0], [0], [1], [0, 0, 1, 1], [], []>} : vector<16x16xf32>, vector<16x16xf32>, vector<16x16xf32> -> vector<16x16xf32>
      %cst_28 = arith.constant dense<0.000000e+00> : vector<16x16xf32>
      %40 = tpu.matmul %1, %37, %cst_28 {dimension_numbers = #tpu.dot_dimension_numbers<[1], [0], [0], [1], [0, 0, 1, 1], [], []>} : vector<16x16xf32>, vector<16x16xf32>, vector<16x16xf32> -> vector<16x16xf32>
      %41 = arith.subf %39, %40 : vector<16x16xf32>
      %cst_29 = arith.constant dense<0.000000e+00> : vector<16x16xf32>
      %42 = tpu.matmul %2, %34, %cst_29 {dimension_numbers = #tpu.dot_dimension_numbers<[1], [0], [0], [1], [0, 0, 1, 1], [], []>} : vector<16x16xf32>, vector<16x16xf32>, vector<16x16xf32> -> vector<16x16xf32>
      %43 = arith.addf %39, %42 : vector<16x16xf32>
      %44 = arith.index_cast %arg16 : i32 to index
      %c0_30 = arith.constant 0 : index
      %c0_31 = arith.constant 0 : index
      %45 = vector.load %arg9[%44, %c0_30, %c0_31] : memref<4x16x16xf32, #tpu.memory_space<vmem>>, vector<1x16x16xf32>
      %46 = vector.shape_cast %45 : vector<1x16x16xf32> to vector<16x16xf32>
      %47 = arith.subf %46, %41 : vector<16x16xf32>
      %48 = arith.mulf %7, %47 : vector<16x16xf32>
      %49 = arith.addf %41, %48 : vector<16x16xf32>
      %50 = arith.index_cast %arg16 : i32 to index
      %c0_32 = arith.constant 0 : index
      %c0_33 = arith.constant 0 : index
      %51 = vector.load %arg10[%50, %c0_32, %c0_33] : memref<4x16x16xf32, #tpu.memory_space<vmem>>, vector<1x16x16xf32>
      %52 = vector.shape_cast %51 : vector<1x16x16xf32> to vector<16x16xf32>
      %53 = arith.subf %52, %43 : vector<16x16xf32>
      %54 = arith.mulf %7, %53 : vector<16x16xf32>
      %55 = arith.addf %43, %54 : vector<16x16xf32>
      %cst_34 = arith.constant dense<0.000000e+00> : vector<16x16xf32>
      %56 = tpu.matmul %49, %5, %cst_34 {dimension_numbers = #tpu.dot_dimension_numbers<[1], [0], [0], [1], [0, 0, 1, 1], [], []>} : vector<16x16xf32>, vector<16x16xf32>, vector<16x16xf32> -> vector<16x16xf32>
      %57 = arith.subf %49, %55 : vector<16x16xf32>
      %cst_35 = arith.constant dense<0.000000e+00> : vector<16x16xf32>
      %58 = tpu.matmul %57, %4, %cst_35 {dimension_numbers = #tpu.dot_dimension_numbers<[1], [0], [0], [1], [0, 0, 1, 1], [], []>} : vector<16x16xf32>, vector<16x16xf32>, vector<16x16xf32> -> vector<16x16xf32>
      %59 = arith.subf %56, %58 : vector<16x16xf32>
      %60 = arith.addf %49, %55 : vector<16x16xf32>
      %cst_36 = arith.constant dense<0.000000e+00> : vector<16x16xf32>
      %61 = tpu.matmul %60, %3, %cst_36 {dimension_numbers = #tpu.dot_dimension_numbers<[1], [0], [0], [1], [0, 0, 1, 1], [], []>} : vector<16x16xf32>, vector<16x16xf32>, vector<16x16xf32> -> vector<16x16xf32>
      %62 = arith.subf %56, %61 : vector<16x16xf32>
      %63 = arith.addf %59, %62 : vector<16x16xf32>
      %cst_37 = arith.constant dense<0.000000e+00> : vector<16x16xf32>
      %64 = tpu.matmul %0, %63, %cst_37 {dimension_numbers = #tpu.dot_dimension_numbers<[1], [0], [0], [1], [0, 0, 1, 1], [], []>} : vector<16x16xf32>, vector<16x16xf32>, vector<16x16xf32> -> vector<16x16xf32>
      %cst_38 = arith.constant dense<0.000000e+00> : vector<16x16xf32>
      %65 = tpu.matmul %1, %62, %cst_38 {dimension_numbers = #tpu.dot_dimension_numbers<[1], [0], [0], [1], [0, 0, 1, 1], [], []>} : vector<16x16xf32>, vector<16x16xf32>, vector<16x16xf32> -> vector<16x16xf32>
      %66 = arith.subf %64, %65 : vector<16x16xf32>
      %cst_39 = arith.constant dense<0.000000e+00> : vector<16x16xf32>
      %67 = tpu.matmul %2, %59, %cst_39 {dimension_numbers = #tpu.dot_dimension_numbers<[1], [0], [0], [1], [0, 0, 1, 1], [], []>} : vector<16x16xf32>, vector<16x16xf32>, vector<16x16xf32> -> vector<16x16xf32>
      %68 = arith.addf %64, %67 : vector<16x16xf32>
      %69 = vector.broadcast %11 : vector<1x1xf32> to vector<16x16xf32>
      %70 = arith.subf %66, %69 : vector<16x16xf32>
      %71 = vector.broadcast %18 : vector<1x1xf32> to vector<16x16xf32>
      %72 = arith.mulf %70, %71 : vector<16x16xf32>
      %73 = arith.index_cast %arg16 : i32 to index
      %c0_40 = arith.constant 0 : index
      %c0_41 = arith.constant 0 : index
      %74 = vector.load %arg14[%73, %c0_40, %c0_41] : memref<4x16x16xf32, #tpu.memory_space<vmem>>, vector<1x16x16xf32>
      %75 = vector.shape_cast %74 : vector<1x16x16xf32> to vector<16x16xf32>
      %76 = vector.shape_cast %72 : vector<16x16xf32> to vector<1x16x16xf32>
      tpu.vector_store %arg14[%73, %c0_40, %c0_41], %76 {strides = array<i32>} : memref<4x16x16xf32, #tpu.memory_space<vmem>>, vector<1x16x16xf32>,
      %cst_42 = arith.constant 0.000000e+00 : f32
      %77 = vector.broadcast %cst_42 : f32 to vector<1x1xf32>
      %78 = arith.subf %77, %18 : vector<1x1xf32>
      %79 = vector.broadcast %78 : vector<1x1xf32> to vector<16x16xf32>
      %80 = arith.mulf %68, %79 : vector<16x16xf32>
      %81 = arith.index_cast %arg16 : i32 to index
      %c0_43 = arith.constant 0 : index
      %c0_44 = arith.constant 0 : index
      %82 = vector.load %arg15[%81, %c0_43, %c0_44] : memref<4x16x16xf32, #tpu.memory_space<vmem>>, vector<1x16x16xf32>
      %83 = vector.shape_cast %82 : vector<1x16x16xf32> to vector<16x16xf32>
      %84 = vector.shape_cast %80 : vector<16x16xf32> to vector<1x16x16xf32>
      tpu.vector_store %arg15[%81, %c0_43, %c0_44], %84 {strides = array<i32>} : memref<4x16x16xf32, #tpu.memory_space<vmem>>, vector<1x16x16xf32>,
    }
    %c4_i32_14 = arith.constant 4 : i32
    return
  }
  func.func @transform_0(%arg0: i32) -> (i32, i32) {
    %c0_i32 = arith.constant 0 : i32
    %c0_i32_0 = arith.constant 0 : i32
    %c0_i32_1 = arith.constant 0 : i32
    return %c0_i32, %c0_i32_0 : i32, i32
  }
  func.func @transform_1(%arg0: i32) -> (i32, i32) {
    %c0_i32 = arith.constant 0 : i32
    %c0_i32_0 = arith.constant 0 : i32
    %c0_i32_1 = arith.constant 0 : i32
    return %c0_i32, %c0_i32_0 : i32, i32
  }
  func.func @transform_2(%arg0: i32) -> (i32, i32) {
    %c0_i32 = arith.constant 0 : i32
    %c0_i32_0 = arith.constant 0 : i32
    %c0_i32_1 = arith.constant 0 : i32
    return %c0_i32, %c0_i32_0 : i32, i32
  }
  func.func @transform_3(%arg0: i32) -> (i32, i32) {
    %c0_i32 = arith.constant 0 : i32
    %c0_i32_0 = arith.constant 0 : i32
    %c0_i32_1 = arith.constant 0 : i32
    return %c0_i32, %c0_i32_0 : i32, i32
  }
  func.func @transform_4(%arg0: i32) -> (i32, i32) {
    %c0_i32 = arith.constant 0 : i32
    %c0_i32_0 = arith.constant 0 : i32
    %c0_i32_1 = arith.constant 0 : i32
    return %c0_i32, %c0_i32_0 : i32, i32
  }
  func.func @transform_5(%arg0: i32) -> (i32, i32) {
    %c0_i32 = arith.constant 0 : i32
    %c0_i32_0 = arith.constant 0 : i32
    %c0_i32_1 = arith.constant 0 : i32
    return %c0_i32, %c0_i32_0 : i32, i32
  }
  func.func @transform_6(%arg0: i32) -> (i32, i32, i32) {
    %c0_i32 = arith.constant 0 : i32
    %c0_i32_0 = arith.constant 0 : i32
    %c0_i32_1 = arith.constant 0 : i32
    return %arg0, %c0_i32, %c0_i32_0 : i32, i32, i32
  }
  func.func @transform_7(%arg0: i32) -> (i32, i32, i32) {
    %c0_i32 = arith.constant 0 : i32
    %c0_i32_0 = arith.constant 0 : i32
    %c0_i32_1 = arith.constant 0 : i32
    return %arg0, %c0_i32, %c0_i32_0 : i32, i32, i32
  }
  func.func @transform_8(%arg0: i32) -> (i32, i32, i32) {
    %c0_i32 = arith.constant 0 : i32
    %c0_i32_0 = arith.constant 0 : i32
    %c0_i32_1 = arith.constant 0 : i32
    return %arg0, %c0_i32, %c0_i32_0 : i32, i32, i32
  }
  func.func @transform_9(%arg0: i32) -> (i32, i32, i32) {
    %c0_i32 = arith.constant 0 : i32
    %c0_i32_0 = arith.constant 0 : i32
    %c0_i32_1 = arith.constant 0 : i32
    return %arg0, %c0_i32, %c0_i32_0 : i32, i32, i32
  }
  func.func @transform_10(%arg0: i32) -> (i32, i32, i32) {
    %c0_i32 = arith.constant 0 : i32
    %c0_i32_0 = arith.constant 0 : i32
    %c0_i32_1 = arith.constant 0 : i32
    %c0_i32_2 = arith.constant 0 : i32
    return %c0_i32, %c0_i32_0, %c0_i32_1 : i32, i32, i32
  }
  func.func @transform_11(%arg0: i32) -> (i32, i32, i32) {
    %c0_i32 = arith.constant 0 : i32
    %c0_i32_0 = arith.constant 0 : i32
    %c0_i32_1 = arith.constant 0 : i32
    return %arg0, %c0_i32, %c0_i32_0 : i32, i32, i32
  }
  func.func @transform_12(%arg0: i32) -> (i32, i32, i32) {
    %c0_i32 = arith.constant 0 : i32
    %c0_i32_0 = arith.constant 0 : i32
    %c0_i32_1 = arith.constant 0 : i32
    return %arg0, %c0_i32, %c0_i32_0 : i32, i32, i32
  }
  func.func @transform_13(%arg0: i32) -> (i32, i32, i32) {
    %c0_i32 = arith.constant 0 : i32
    %c0_i32_0 = arith.constant 0 : i32
    %c0_i32_1 = arith.constant 0 : i32
    return %arg0, %c0_i32, %c0_i32_0 : i32, i32, i32
  }
  func.func @transform_14(%arg0: i32) -> (i32, i32, i32) {
    %c0_i32 = arith.constant 0 : i32
    %c0_i32_0 = arith.constant 0 : i32
    %c0_i32_1 = arith.constant 0 : i32
    return %arg0, %c0_i32, %c0_i32_0 : i32, i32, i32
  }
}

</mosaic_0001>

<llo_original>
// kernel: tpu_custom_call.1
$region0: #{tpu_custom_call.1}
  #allocation0 [shape = 'u32[]', space=smem, size = 0x4, offset = 0x4, fixed_abs, tag = 'smem constant byte address 0x4 - core index']
  #allocation1 [shape = 'u32[144,128]{1,0:T(1,128)}', space=vmem, size = 0x12000, scoped, tag = 'internal scratch']
  %s0 = inlined_call_operand.vmem [shape: f32[16,16], index: 0, kind: input, shape index: {}]
  %s1 = inlined_call_operand.hbm [shape: f32[16,16], index: 1, kind: input, shape index: {}]
  %s2 = inlined_call_operand.hbm [shape: f32[16,16], index: 2, kind: input, shape index: {}]
  %s3 = inlined_call_operand.hbm [shape: f32[16,16], index: 3, kind: input, shape index: {}]
  %s4 = inlined_call_operand.vmem [shape: f32[16,16], index: 4, kind: input, shape index: {}]
  %s5 = inlined_call_operand.hbm [shape: f32[16,16], index: 5, kind: input, shape index: {}]
  %s6 = inlined_call_operand.hbm [shape: f32[8,16,16], index: 6, kind: input, shape index: {}]
  %s7 = inlined_call_operand.hbm [shape: f32[8,16,16], index: 7, kind: input, shape index: {}]
  %s8 = inlined_call_operand.hbm [shape: f32[8,16,16], index: 8, kind: input, shape index: {}]
  %s9 = inlined_call_operand.hbm [shape: f32[8,16,16], index: 9, kind: input, shape index: {}]
  %s10 = inlined_call_operand.vmem [shape: f32[1,16,16], index: 10, kind: input, shape index: {}]
  %s11 = inlined_call_operand.vmem [shape: f32[8,1,1], index: 11, kind: input, shape index: {}]
  %s12 = inlined_call_operand.vmem [shape: f32[8,1,1], index: 12, kind: input, shape index: {}]
  %s13 = inlined_call_operand.hbm [shape: f32[8,16,16], index: 13, kind: output, shape index: {0}]
  %s14 = inlined_call_operand.hbm [shape: f32[8,16,16], index: 14, kind: output, shape index: {1}]
  %15 = xla_tuple %s13, %s14
  %s16 = sld [smem:[#allocation0]]
  $region132: #{tpu_custom_call.1} parent=0
    _
  %s18 = ssub.s32 1, %s16
  %s19 = scalar_select 0, %s18, %s16
  $region1: #{tpu_custom_call.1} parent=0
    #allocation2 [shape = 'u8[8192]{0}', space=vmem, size = 0x2000, scoped, tag = 'input window, operand 1, single buffered']
    #allocation3 [shape = 's32[2]{0}', space=sflag, size = 0x8, scoped, tag = 'scoped memory for tpu_custom_call.1']
    #allocation4 [shape = 's32[2]{0}', space=sflag, size = 0x8, scoped, tag = 'scoped memory for tpu_custom_call.1']
    #allocation5 [shape = 'u8[8192]{0}', space=vmem, size = 0x2000, scoped, tag = 'input window, operand 2, single buffered']
    #allocation6 [shape = 's32[1]{0}', space=sflag, size = 0x4, scoped, tag = 'scoped memory for tpu_custom_call.1']
    #allocation7 [shape = 'u8[8192]{0}', space=vmem, size = 0x2000, scoped, tag = 'input window, operand 3, single buffered']
    #allocation8 [shape = 'u8[8192]{0}', space=vmem, size = 0x2000, scoped, tag = 'input window, operand 5, single buffered']
    #allocation9 [shape = 's32[1]{0}', space=sflag, size = 0x4, scoped, tag = 'scoped memory for tpu_custom_call.1']
    #allocation10 [shape = 'u8[65536]{0}', space=vmem, size = 0x10000, scoped, tag = 'input window, operand 6']
    #allocation11 [shape = 'u8[65536]{0}', space=vmem, size = 0x10000, scoped, tag = 'input window, operand 7']
    #allocation12 [shape = 'u8[65536]{0}', space=vmem, size = 0x10000, scoped, tag = 'input window, operand 8']
    #allocation13 [shape = 'u8[65536]{0}', space=vmem, size = 0x10000, scoped, tag = 'input window, operand 9']
    #allocation14 [shape = 'u8[65536]{0}', space=vmem, size = 0x10000, scoped, tag = 'output window, operand 0']
    #allocation15 [shape = 'u8[65536]{0}', space=vmem, size = 0x10000, scoped, tag = 'output window, operand 1']
    #allocation16 [shape = 's32[2]{0}', space=sflag, size = 0x8, scoped, tag = 'scoped memory for tpu_custom_call.1']
    %20 = vsyncpa [#allocation3], 0
    %21 = vsyncpa [#allocation6], 0
    %22 = vsyncpa [#allocation9], 0
    %23 = vsyncpa [#allocation4], 0
    %s24 = scalar_lea.sflag [#allocation4], 1
    %25 = vsyncpa %s24, 0
    %26 = vsyncpa [#allocation16], 0
    %s27 = scalar_lea.sflag [#allocation16], 1
    %28 = vsyncpa %s27, 0
    loop: start=0, step=1, limit=4
    $region2: #{tpu_custom_call.1} parent=1 // loop_pre_header
      _
    $region3: #{tpu_custom_call.1} parent=1 // loop_header
      %s30 = sphi 0, %s34
      %p31 = scmp.ge.s32.totalorder %s30, 4
      %s38 = sphi 0, %s38
      %s40 = sphi 0, %s38
      %s41 = sphi 0, %s40
      %s55 = sphi 0, %s41
      %s59 = sphi 0, %s59
      %s61 = sphi 0, %s59
      %s62 = sphi 0, %s61
      %s76 = sphi 0, %s62
      %s80 = sphi 0, %s80
      %s82 = sphi 0, %s80
      %s83 = sphi 0, %s82
      %s97 = sphi 0, %s83
      %s101 = sphi 0, %s101
      %s103 = sphi 0, %s101
      %s104 = sphi 0, %s103
      %s118 = sphi 0, %s104
      %s122 = sphi 0, %s122
      %s124 = sphi 0, %s122
      %s125 = sphi 0, %s124
      %s139 = sphi 0, %s125
      %s143 = sphi 0, %s143
      %s145 = sphi 0, %s143
      %s146 = sphi 0, %s145
      %s160 = sphi 0, %s146
      %s166 = sphi 0, %s168
      %s169 = sphi 0, %s166
      %s170 = sphi 0, %s169
      %s186 = sphi 0, %s170
      %s192 = sphi 0, %s194
      %s195 = sphi 0, %s192
      %s196 = sphi 0, %s195
      %s212 = sphi 0, %s196
      %s218 = sphi 0, %s220
      %s221 = sphi 0, %s218
      %s222 = sphi 0, %s221
      %s238 = sphi 0, %s222
      %s244 = sphi 0, %s246
      %s247 = sphi 0, %s244
      %s248 = sphi 0, %s247
      %s264 = sphi 0, %s248
      %s268 = sphi 0, %s268
      %s270 = sphi 0, %s268
      %s271 = sphi 0, %s270
      %s285 = sphi 0, %s271
      %s291 = sphi 0, %s293
      %s294 = sphi 0, %s291
      %s295 = sphi 0, %s294
      %s311 = sphi 0, %s295
      %s317 = sphi 0, %s319
      %s320 = sphi 0, %s317
      %s321 = sphi 0, %s320
      %s337 = sphi 0, %s321
      %s343 = sphi 0, %s345
      %s346 = sphi 0, %s343
      %s347 = sphi 0, %s346
      %s363 = sphi 0, %s347
      %s369 = sphi 0, %s371
      %s372 = sphi 0, %s369
      %s373 = sphi 0, %s372
      %s389 = sphi 0, %s373
    $region4: #{tpu_custom_call.1} parent=1 // loop_header_branch
      %33 = sbr.rel (%p31) target = $region8
    $region5: #{tpu_custom_call.1} parent=1 // loop_body
      %s35 = ssub.s32 %s30, 1
      %s36 = ssub.s32 %s30, 2
      %s37 = sadd.s32 %s30, 1
      %s39 = sadd.s32 %s38, 1
      %p42 = scmp.eq.s32.totalorder %s30, 1
      %p43 = scmp.ne.s32.totalorder %s38, %s40
      %p44 = scmp.eq.s32.totalorder %s30, 0
      %p45 = por %p43, %p44
      %p46 = scmp.ne.s32.totalorder %s38, %s40
      %p47 = scmp.eq.s32.totalorder %s35, 1
      %p48 = por %p46, %p47
      %p49 = scmp.ne.s32.totalorder %s40, %s41
      %p50 = scmp.eq.s32.totalorder %s35, 0
      %p51 = por %p49, %p50
      %p52 = scmp.ne.s32.totalorder %s40, %s41
      %p53 = scmp.eq.s32.totalorder %s36, 1
      %p54 = por %p52, %p53
      %p56 = scmp.ne.s32.totalorder %s41, %s55
      %p57 = scmp.eq.s32.totalorder %s36, 0
      %p58 = por %p56, %p57
      %s60 = sadd.s32 %s59, 1
      %p63 = scmp.eq.s32.totalorder %s30, 1
      %p64 = scmp.ne.s32.totalorder %s59, %s61
      %p65 = scmp.eq.s32.totalorder %s30, 0
      %p66 = por %p64, %p65
      %p67 = scmp.ne.s32.totalorder %s59, %s61
      %p68 = scmp.eq.s32.totalorder %s35, 1
      %p69 = por %p67, %p68
      %p70 = scmp.ne.s32.totalorder %s61, %s62
      %p71 = scmp.eq.s32.totalorder %s35, 0
      %p72 = por %p70, %p71
      %p73 = scmp.ne.s32.totalorder %s61, %s62
      %p74 = scmp.eq.s32.totalorder %s36, 1
      %p75 = por %p73, %p74
      %p77 = scmp.ne.s32.totalorder %s62, %s76
      %p78 = scmp.eq.s32.totalorder %s36, 0
      %p79 = por %p77, %p78
      %s81 = sadd.s32 %s80, 1
      %p84 = scmp.eq.s32.totalorder %s30, 1
      %p85 = scmp.ne.s32.totalorder %s80, %s82
      %p86 = scmp.eq.s32.totalorder %s30, 0
      %p87 = por %p85, %p86
      %p88 = scmp.ne.s32.totalorder %s80, %s82
      %p89 = scmp.eq.s32.totalorder %s35, 1
      %p90 = por %p88, %p89
      %p91 = scmp.ne.s32.totalorder %s82, %s83
      %p92 = scmp.eq.s32.totalorder %s35, 0
      %p93 = por %p91, %p92
      %p94 = scmp.ne.s32.totalorder %s82, %s83
      %p95 = scmp.eq.s32.totalorder %s36, 1
      %p96 = por %p94, %p95
      %p98 = scmp.ne.s32.totalorder %s83, %s97
      %p99 = scmp.eq.s32.totalorder %s36, 0
      %p100 = por %p98, %p99
      %s102 = sadd.s32 %s101, 1
      %p105 = scmp.eq.s32.totalorder %s30, 1
      %p106 = scmp.ne.s32.totalorder %s101, %s103
      %p107 = scmp.eq.s32.totalorder %s30, 0
      %p108 = por %p106, %p107
      %p109 = scmp.ne.s32.totalorder %s101, %s103
      %p110 = scmp.eq.s32.totalorder %s35, 1
      %p111 = por %p109, %p110
      %p112 = scmp.ne.s32.totalorder %s103, %s104
      %p113 = scmp.eq.s32.totalorder %s35, 0
      %p114 = por %p112, %p113
      %p115 = scmp.ne.s32.totalorder %s103, %s104
      %p116 = scmp.eq.s32.totalorder %s36, 1
      %p117 = por %p115, %p116
      %p119 = scmp.ne.s32.totalorder %s104, %s118
      %p120 = scmp.eq.s32.totalorder %s36, 0
      %p121 = por %p119, %p120
      %s123 = sadd.s32 %s122, 1
      %p126 = scmp.eq.s32.totalorder %s30, 1
      %p127 = scmp.ne.s32.totalorder %s122, %s124
      %p128 = scmp.eq.s32.totalorder %s30, 0
      %p129 = por %p127, %p128
      %p130 = scmp.ne.s32.totalorder %s122, %s124
      %p131 = scmp.eq.s32.totalorder %s35, 1
      %p132 = por %p130, %p131
      %p133 = scmp.ne.s32.totalorder %s124, %s125
      %p134 = scmp.eq.s32.totalorder %s35, 0
      %p135 = por %p133, %p134
      %p136 = scmp.ne.s32.totalorder %s124, %s125
      %p137 = scmp.eq.s32.totalorder %s36, 1
      %p138 = por %p136, %p137
      %p140 = scmp.ne.s32.totalorder %s125, %s139
      %p141 = scmp.eq.s32.totalorder %s36, 0
      %p142 = por %p140, %p141
      %s144 = sadd.s32 %s143, 1
      %p147 = scmp.eq.s32.totalorder %s30, 1
      %p148 = scmp.ne.s32.totalorder %s143, %s145
      %p149 = scmp.eq.s32.totalorder %s30, 0
      %p150 = por %p148, %p149
      %p151 = scmp.ne.s32.totalorder %s143, %s145
      %p152 = scmp.eq.s32.totalorder %s35, 1
      %p153 = por %p151, %p152
      %p154 = scmp.ne.s32.totalorder %s145, %s146
      %p155 = scmp.eq.s32.totalorder %s35, 0
      %p156 = por %p154, %p155
      %p157 = scmp.ne.s32.totalorder %s145, %s146
      %p158 = scmp.eq.s32.totalorder %s36, 1
      %p159 = por %p157, %p158
      %p161 = scmp.ne.s32.totalorder %s146, %s160
      %p162 = scmp.eq.s32.totalorder %s36, 0
      %p163 = por %p161, %p162
      %s164 = ssub.s32 %s30, %s37
      %p165 = scmp.eq.s32.totalorder %s164, 0
      %s167 = sadd.s32 %s166, 1
      %s168 = scalar_select %p165, %s166, %s167
      %p171 = pneg %p165
      %p172 = scmp.eq.s32.totalorder %s30, 1
      %p173 = por %p171, %p172
      %p174 = scmp.ne.s32.totalorder %s166, %s169
      %p175 = scmp.eq.s32.totalorder %s30, 0
      %p176 = por %p174, %p175
      %p177 = scmp.ne.s32.totalorder %s166, %s169
      %p178 = scmp.eq.s32.totalorder %s35, 1
      %p179 = por %p177, %p178
      %p180 = scmp.ne.s32.totalorder %s169, %s170
      %p181 = scmp.eq.s32.totalorder %s35, 0
      %p182 = por %p180, %p181
      %p183 = scmp.ne.s32.totalorder %s169, %s170
      %p184 = scmp.eq.s32.totalorder %s36, 1
      %p185 = por %p183, %p184
      %p187 = scmp.ne.s32.totalorder %s170, %s186
      %p188 = scmp.eq.s32.totalorder %s36, 0
      %p189 = por %p187, %p188
      %s190 = ssub.s32 %s30, %s37
      %p191 = scmp.eq.s32.totalorder %s190, 0
      %s193 = sadd.s32 %s192, 1
      %s194 = scalar_select %p191, %s192, %s193
      %p197 = pneg %p191
      %p198 = scmp.eq.s32.totalorder %s30, 1
      %p199 = por %p197, %p198
      %p200 = scmp.ne.s32.totalorder %s192, %s195
      %p201 = scmp.eq.s32.totalorder %s30, 0
      %p202 = por %p200, %p201
      %p203 = scmp.ne.s32.totalorder %s192, %s195
      %p204 = scmp.eq.s32.totalorder %s35, 1
      %p205 = por %p203, %p204
      %p206 = scmp.ne.s32.totalorder %s195, %s196
      %p207 = scmp.eq.s32.totalorder %s35, 0
      %p208 = por %p206, %p207
      %p209 = scmp.ne.s32.totalorder %s195, %s196
      %p210 = scmp.eq.s32.totalorder %s36, 1
      %p211 = por %p209, %p210
      %p213 = scmp.ne.s32.totalorder %s196, %s212
      %p214 = scmp.eq.s32.totalorder %s36, 0
      %p215 = por %p213, %p214
      %s216 = ssub.s32 %s30, %s37
      %p217 = scmp.eq.s32.totalorder %s216, 0
      %s219 = sadd.s32 %s218, 1
      %s220 = scalar_select %p217, %s218, %s219
      %p223 = pneg %p217
      %p224 = scmp.eq.s32.totalorder %s30, 1
      %p225 = por %p223, %p224
      %p226 = scmp.ne.s32.totalorder %s218, %s221
      %p227 = scmp.eq.s32.totalorder %s30, 0
      %p228 = por %p226, %p227
      %p229 = scmp.ne.s32.totalorder %s218, %s221
      %p230 = scmp.eq.s32.totalorder %s35, 1
      %p231 = por %p229, %p230
      %p232 = scmp.ne.s32.totalorder %s221, %s222
      %p233 = scmp.eq.s32.totalorder %s35, 0
      %p234 = por %p232, %p233
      %p235 = scmp.ne.s32.totalorder %s221, %s222
      %p236 = scmp.eq.s32.totalorder %s36, 1
      %p237 = por %p235, %p236
      %p239 = scmp.ne.s32.totalorder %s222, %s238
      %p240 = scmp.eq.s32.totalorder %s36, 0
      %p241 = por %p239, %p240
      %s242 = ssub.s32 %s30, %s37
      %p243 = scmp.eq.s32.totalorder %s242, 0
      %s245 = sadd.s32 %s244, 1
      %s246 = scalar_select %p243, %s244, %s245
      %p249 = pneg %p243
      %p250 = scmp.eq.s32.totalorder %s30, 1
      %p251 = por %p249, %p250
      %p252 = scmp.ne.s32.totalorder %s244, %s247
      %p253 = scmp.eq.s32.totalorder %s30, 0
      %p254 = por %p252, %p253
      %p255 = scmp.ne.s32.totalorder %s244, %s247
      %p256 = scmp.eq.s32.totalorder %s35, 1
      %p257 = por %p255, %p256
      %p258 = scmp.ne.s32.totalorder %s247, %s248
      %p259 = scmp.eq.s32.totalorder %s35, 0
      %p260 = por %p258, %p259
      %p261 = scmp.ne.s32.totalorder %s247, %s248
      %p262 = scmp.eq.s32.totalorder %s36, 1
      %p263 = por %p261, %p262
      %p265 = scmp.ne.s32.totalorder %s248, %s264
      %p266 = scmp.eq.s32.totalorder %s36, 0
      %p267 = por %p265, %p266
      %s269 = sadd.s32 %s268, 1
      %p272 = scmp.eq.s32.totalorder %s30, 1
      %p273 = scmp.ne.s32.totalorder %s268, %s270
      %p274 = scmp.eq.s32.totalorder %s30, 0
      %p275 = por %p273, %p274
      %p276 = scmp.ne.s32.totalorder %s268, %s270
      %p277 = scmp.eq.s32.totalorder %s35, 1
      %p278 = por %p276, %p277
      %p279 = scmp.ne.s32.totalorder %s270, %s271
      %p280 = scmp.eq.s32.totalorder %s35, 0
      %p281 = por %p279, %p280
      %p282 = scmp.ne.s32.totalorder %s270, %s271
      %p283 = scmp.eq.s32.totalorder %s36, 1
      %p284 = por %p282, %p283
      %p286 = scmp.ne.s32.totalorder %s271, %s285
      %p287 = scmp.eq.s32.totalorder %s36, 0
      %p288 = por %p286, %p287
      %s289 = ssub.s32 %s30, %s37
      %p290 = scmp.eq.s32.totalorder %s289, 0
      %s292 = sadd.s32 %s291, 1
      %s293 = scalar_select %p290, %s291, %s292
      %p296 = pneg %p290
      %p297 = scmp.eq.s32.totalorder %s30, 1
      %p298 = por %p296, %p297
      %p299 = scmp.ne.s32.totalorder %s291, %s294
      %p300 = scmp.eq.s32.totalorder %s30, 0
      %p301 = por %p299, %p300
      %p302 = scmp.ne.s32.totalorder %s291, %s294
      %p303 = scmp.eq.s32.totalorder %s35, 1
      %p304 = por %p302, %p303
      %p305 = scmp.ne.s32.totalorder %s294, %s295
      %p306 = scmp.eq.s32.totalorder %s35, 0
      %p307 = por %p305, %p306
      %p308 = scmp.ne.s32.totalorder %s294, %s295
      %p309 = scmp.eq.s32.totalorder %s36, 1
      %p310 = por %p308, %p309
      %p312 = scmp.ne.s32.totalorder %s295, %s311
      %p313 = scmp.eq.s32.totalorder %s36, 0
      %p314 = por %p312, %p313
      %s315 = ssub.s32 %s30, %s37
      %p316 = scmp.eq.s32.totalorder %s315, 0
      %s318 = sadd.s32 %s317, 1
      %s319 = scalar_select %p316, %s317, %s318
      %p322 = pneg %p316
      %p323 = scmp.eq.s32.totalorder %s30, 1
      %p324 = por %p322, %p323
      %p325 = scmp.ne.s32.totalorder %s317, %s320
      %p326 = scmp.eq.s32.totalorder %s30, 0
      %p327 = por %p325, %p326
      %p328 = scmp.ne.s32.totalorder %s317, %s320
      %p329 = scmp.eq.s32.totalorder %s35, 1
      %p330 = por %p328, %p329
      %p331 = scmp.ne.s32.totalorder %s320, %s321
      %p332 = scmp.eq.s32.totalorder %s35, 0
      %p333 = por %p331, %p332
      %p334 = scmp.ne.s32.totalorder %s320, %s321
      %p335 = scmp.eq.s32.totalorder %s36, 1
      %p336 = por %p334, %p335
      %p338 = scmp.ne.s32.totalorder %s321, %s337
      %p339 = scmp.eq.s32.totalorder %s36, 0
      %p340 = por %p338, %p339
      %s341 = ssub.s32 %s30, %s37
      %p342 = scmp.eq.s32.totalorder %s341, 0
      %s344 = sadd.s32 %s343, 1
      %s345 = scalar_select %p342, %s343, %s344
      %p348 = pneg %p342
      %p349 = scmp.eq.s32.totalorder %s30, 1
      %p350 = por %p348, %p349
      %p351 = scmp.ne.s32.totalorder %s343, %s346
      %p352 = scmp.eq.s32.totalorder %s30, 0
      %p353 = por %p351, %p352
      %p354 = scmp.ne.s32.totalorder %s343, %s346
      %p355 = scmp.eq.s32.totalorder %s35, 1
      %p356 = por %p354, %p355
      %p357 = scmp.ne.s32.totalorder %s346, %s347
      %p358 = scmp.eq.s32.totalorder %s35, 0
      %p359 = por %p357, %p358
      %p360 = scmp.ne.s32.totalorder %s346, %s347
      %p361 = scmp.eq.s32.totalorder %s36, 1
      %p362 = por %p360, %p361
      %p364 = scmp.ne.s32.totalorder %s347, %s363
      %p365 = scmp.eq.s32.totalorder %s36, 0
      %p366 = por %p364, %p365
      %s367 = ssub.s32 %s30, %s37
      %p368 = scmp.eq.s32.totalorder %s367, 0
      %s370 = sadd.s32 %s369, 1
      %s371 = scalar_select %p368, %s369, %s370
      %p374 = pneg %p368
      %p375 = scmp.eq.s32.totalorder %s30, 1
      %p376 = por %p374, %p375
      %p377 = scmp.ne.s32.totalorder %s369, %s372
      %p378 = scmp.eq.s32.totalorder %s30, 0
      %p379 = por %p377, %p378
      %p380 = scmp.ne.s32.totalorder %s369, %s372
      %p381 = scmp.eq.s32.totalorder %s35, 1
      %p382 = por %p380, %p381
      %p383 = scmp.ne.s32.totalorder %s372, %s373
      %p384 = scmp.eq.s32.totalorder %s35, 0
      %p385 = por %p383, %p384
      %p386 = scmp.ne.s32.totalorder %s372, %s373
      %p387 = scmp.eq.s32.totalorder %s36, 1
      %p388 = por %p386, %p387
      %p390 = scmp.ne.s32.totalorder %s373, %s389
      %p391 = scmp.eq.s32.totalorder %s36, 0
      %p392 = por %p390, %p391
      %p393 = scmp.le.s32.totalorder 1, %s30
      %p394 = scmp.lt.s32.totalorder %s30, 3
      %p395 = pnand %p393, %p394
      %p396 = pneg %p395
      // Predicated region
      $region9: #{tpu_custom_call.1} parent=5 // pred_check
        _
      $region10: #{tpu_custom_call.1} parent=5 // pred_check_branch
        %398 = sbr.rel (%p395) target = $region12
      $region11: #{tpu_custom_call.1} parent=5 // pred_region
        %s399 = ssub.s32 %s30, 1
        // Predicated region
        $region13: #{tpu_custom_call.1} parent=11 // pred_check
          %p400 = pneg %p51
        $region14: #{tpu_custom_call.1} parent=11 // pred_check_branch
          %402 = sbr.rel (%p400) target = $region16
        $region15: #{tpu_custom_call.1} parent=11 // pred_region
          _
        $region16: #{tpu_custom_call.1} parent=11 // pred_fallthru
          _
        // Predicated region
        $region17: #{tpu_custom_call.1} parent=11 // pred_check
          %p403 = pneg %p72
        $region18: #{tpu_custom_call.1} parent=11 // pred_check_branch
          %405 = sbr.rel (%p403) target = $region20
        $region19: #{tpu_custom_call.1} parent=11 // pred_region
          %s407 = ssub.s32 256, 256
          %408 = vsyncadd [#allocation3], %s407
          %s409 = sshll.u32 [#allocation2], 4
          %s410 = int_to_ptr.vmem [resolvable:$true] %s409
          %415 = dma.hbm_to_vmem [thread:$0]  %s1, 256, %s410, [#allocation3], 128, 128, 8
        $region20: #{tpu_custom_call.1} parent=11 // pred_fallthru
          _
        // Predicated region
        $region21: #{tpu_custom_call.1} parent=11 // pred_check
          %p416 = pneg %p93
        $region22: #{tpu_custom_call.1} parent=11 // pred_check_branch
          %418 = sbr.rel (%p416) target = $region24
        $region23: #{tpu_custom_call.1} parent=11 // pred_region
          %s420 = ssub.s32 256, 256
          %421 = vsyncadd [#allocation6], %s420
          %s422 = sshll.u32 [#allocation5], 4
          %s423 = int_to_ptr.vmem [resolvable:$true] %s422
          %428 = dma.hbm_to_vmem [thread:$0]  %s2, 256, %s423, [#allocation6], 128, 128, 8
        $region24: #{tpu_custom_call.1} parent=11 // pred_fallthru
          _
        // Predicated region
        $region25: #{tpu_custom_call.1} parent=11 // pred_check
          %p429 = pneg %p114
        $region26: #{tpu_custom_call.1} parent=11 // pred_check_branch
          %431 = sbr.rel (%p429) target = $region28
        $region27: #{tpu_custom_call.1} parent=11 // pred_region
          %s433 = ssub.s32 256, 256
          %434 = vsyncadd [#allocation6], %s433
          %s435 = sshll.u32 [#allocation7], 4
          %s436 = int_to_ptr.vmem [resolvable:$true] %s435
          %441 = dma.hbm_to_vmem [thread:$0]  %s3, 256, %s436, [#allocation6], 128, 128, 8
        $region28: #{tpu_custom_call.1} parent=11 // pred_fallthru
          _
        // Predicated region
        $region29: #{tpu_custom_call.1} parent=11 // pred_check
          %p442 = pneg %p135
        $region30: #{tpu_custom_call.1} parent=11 // pred_check_branch
          %444 = sbr.rel (%p442) target = $region32
        $region31: #{tpu_custom_call.1} parent=11 // pred_region
          _
        $region32: #{tpu_custom_call.1} parent=11 // pred_fallthru
          _
        // Predicated region
        $region33: #{tpu_custom_call.1} parent=11 // pred_check
          %p445 = pneg %p156
        $region34: #{tpu_custom_call.1} parent=11 // pred_check_branch
          %447 = sbr.rel (%p445) target = $region36
        $region35: #{tpu_custom_call.1} parent=11 // pred_region
          %s449 = ssub.s32 256, 256
          %450 = vsyncadd [#allocation9], %s449
          %s451 = sshll.u32 [#allocation8], 4
          %s452 = int_to_ptr.vmem [resolvable:$true] %s451
          %457 = dma.hbm_to_vmem [thread:$0]  %s5, 256, %s452, [#allocation9], 128, 128, 8
        $region36: #{tpu_custom_call.1} parent=11 // pred_fallthru
          _
        // Predicated region
        $region37: #{tpu_custom_call.1} parent=11 // pred_check
          %p458 = pneg %p281
        $region38: #{tpu_custom_call.1} parent=11 // pred_check_branch
          %460 = sbr.rel (%p458) target = $region40
        $region39: #{tpu_custom_call.1} parent=11 // pred_region
          _
        $region40: #{tpu_custom_call.1} parent=11 // pred_fallthru
          _
      $region12: #{tpu_custom_call.1} parent=5 // pred_fallthru
        _
      %p461 = scmp.lt.s32.totalorder %s30, 2
      // Predicated region
      $region41: #{tpu_custom_call.1} parent=5 // pred_check
        %p462 = pneg %p461
      $region42: #{tpu_custom_call.1} parent=5 // pred_check_branch
        %464 = sbr.rel (%p462) target = $region44
      $region43: #{tpu_custom_call.1} parent=5 // pred_region
        // Predicated region
        $region45: #{tpu_custom_call.1} parent=43 // pred_check
          %p465 = pneg %p176
        $region46: #{tpu_custom_call.1} parent=43 // pred_check_branch
          %467 = sbr.rel (%p465) target = $region48
        $region47: #{tpu_custom_call.1} parent=43 // pred_region
          %s468 = sand.u32 %s30, 1
          %s469 = scalar_lea.sflag [#allocation3], %s468
          %s470 = sand.u32 %s166, 1
          %s471 = smul.addr %s470, 64
          %s472 = scalar_lea.vmem [#allocation10], %s471
          %s473 = smul.u32 4, %s30
          %s475 = ssub.s32 1024, 1024
          %476 = vsyncadd %s469, %s475
          %s477 = smul.addr %s473, 2
          %s478 = smul.addr %s477, 128
          %s479 = scalar_lea.hbm %s6, %s478
          %s480 = sshll.u32 %s472, 4
          %s481 = int_to_ptr.vmem [resolvable:$true] %s480
          %486 = dma.hbm_to_vmem [thread:$0]  %s479, 1024, %s481, %s469, 128, 128, 8
        $region48: #{tpu_custom_call.1} parent=43 // pred_fallthru
          _
        // Predicated region
        $region49: #{tpu_custom_call.1} parent=43 // pred_check
          %p487 = pneg %p202
        $region50: #{tpu_custom_call.1} parent=43 // pred_check_branch
          %489 = sbr.rel (%p487) target = $region52
        $region51: #{tpu_custom_call.1} parent=43 // pred_region
          %s490 = sand.u32 %s30, 1
          %s491 = scalar_lea.sflag [#allocation3], %s490
          %s492 = sand.u32 %s192, 1
          %s493 = smul.addr %s492, 64
          %s494 = scalar_lea.vmem [#allocation11], %s493
          %s495 = smul.u32 4, %s30
          %s497 = ssub.s32 1024, 1024
          %498 = vsyncadd %s491, %s497
          %s499 = smul.addr %s495, 2
          %s500 = smul.addr %s499, 128
          %s501 = scalar_lea.hbm %s7, %s500
          %s502 = sshll.u32 %s494, 4
          %s503 = int_to_ptr.vmem [resolvable:$true] %s502
          %508 = dma.hbm_to_vmem [thread:$0]  %s501, 1024, %s503, %s491, 128, 128, 8
        $region52: #{tpu_custom_call.1} parent=43 // pred_fallthru
          _
        // Predicated region
        $region53: #{tpu_custom_call.1} parent=43 // pred_check
          %p509 = pneg %p228
        $region54: #{tpu_custom_call.1} parent=43 // pred_check_branch
          %511 = sbr.rel (%p509) target = $region56
        $region55: #{tpu_custom_call.1} parent=43 // pred_region
          %s512 = sand.u32 %s30, 1
          %s513 = scalar_lea.sflag [#allocation3], %s512
          %s514 = sand.u32 %s218, 1
          %s515 = smul.addr %s514, 64
          %s516 = scalar_lea.vmem [#allocation12], %s515
          %s517 = smul.u32 4, %s30
          %s519 = ssub.s32 1024, 1024
          %520 = vsyncadd %s513, %s519
          %s521 = smul.addr %s517, 2
          %s522 = smul.addr %s521, 128
          %s523 = scalar_lea.hbm %s8, %s522
          %s524 = sshll.u32 %s516, 4
          %s525 = int_to_ptr.vmem [resolvable:$true] %s524
          %530 = dma.hbm_to_vmem [thread:$0]  %s523, 1024, %s525, %s513, 128, 128, 8
        $region56: #{tpu_custom_call.1} parent=43 // pred_fallthru
          _
        // Predicated region
        $region57: #{tpu_custom_call.1} parent=43 // pred_check
          %p531 = pneg %p254
        $region58: #{tpu_custom_call.1} parent=43 // pred_check_branch
          %533 = sbr.rel (%p531) target = $region60
        $region59: #{tpu_custom_call.1} parent=43 // pred_region
          %s534 = sand.u32 %s30, 1
          %s535 = scalar_lea.sflag [#allocation3], %s534
          %s536 = sand.u32 %s244, 1
          %s537 = smul.addr %s536, 64
          %s538 = scalar_lea.vmem [#allocation13], %s537
          %s539 = smul.u32 4, %s30
          %s541 = ssub.s32 1024, 1024
          %542 = vsyncadd %s535, %s541
          %s543 = smul.addr %s539, 2
          %s544 = smul.addr %s543, 128
          %s545 = scalar_lea.hbm %s9, %s544
          %s546 = sshll.u32 %s538, 4
          %s547 = int_to_ptr.vmem [resolvable:$true] %s546
          %552 = dma.hbm_to_vmem [thread:$0]  %s545, 1024, %s547, %s535, 128, 128, 8
        $region60: #{tpu_custom_call.1} parent=43 // pred_fallthru
          _
        // Predicated region
        $region61: #{tpu_custom_call.1} parent=43 // pred_check
          %p553 = pneg %p301
        $region62: #{tpu_custom_call.1} parent=43 // pred_check_branch
          %555 = sbr.rel (%p553) target = $region64
        $region63: #{tpu_custom_call.1} parent=43 // pred_region
          %s556 = smul.u32 4, %s30
          %p557 = scmp.lt.s32.totalorder %s556, 7
          %s558 = scalar_select %p557, %s556, 7
          %s559 = scalar_lea.vmem %s11, %s558
          %s560 = smul.u32 4, %s30
        $region64: #{tpu_custom_call.1} parent=43 // pred_fallthru
          _
        // Predicated region
        $region65: #{tpu_custom_call.1} parent=43 // pred_check
          %p561 = pneg %p327
        $region66: #{tpu_custom_call.1} parent=43 // pred_check_branch
          %563 = sbr.rel (%p561) target = $region68
        $region67: #{tpu_custom_call.1} parent=43 // pred_region
          %s564 = smul.u32 4, %s30
          %p565 = scmp.lt.s32.totalorder %s564, 7
          %s566 = scalar_select %p565, %s564, 7
          %s567 = scalar_lea.vmem %s12, %s566
          %s568 = smul.u32 4, %s30
        $region68: #{tpu_custom_call.1} parent=43 // pred_fallthru
          _
      $region44: #{tpu_custom_call.1} parent=5 // pred_fallthru
        _
      %p569 = scmp.le.s32.totalorder 1, %s30
      %p570 = scmp.lt.s32.totalorder %s30, 3
      %p571 = pnand %p569, %p570
      %p572 = pneg %p571
      // Predicated region
      $region69: #{tpu_custom_call.1} parent=5 // pred_check
        _
      $region70: #{tpu_custom_call.1} parent=5 // pred_check_branch
        %574 = sbr.rel (%p571) target = $region72
      $region71: #{tpu_custom_call.1} parent=5 // pred_region
        %s575 = ssub.s32 %s30, 1
        // Predicated region
        $region73: #{tpu_custom_call.1} parent=71 // pred_check
          %p576 = pneg %p72
        $region74: #{tpu_custom_call.1} parent=71 // pred_check_branch
          %578 = sbr.rel (%p576) target = $region76
        $region75: #{tpu_custom_call.1} parent=71 // pred_region
          %579 = dma.done [#allocation3], 256
        $region76: #{tpu_custom_call.1} parent=71 // pred_fallthru
          _
        // Predicated region
        $region77: #{tpu_custom_call.1} parent=71 // pred_check
          %p580 = pneg %p93
        $region78: #{tpu_custom_call.1} parent=71 // pred_check_branch
          %582 = sbr.rel (%p580) target = $region80
        $region79: #{tpu_custom_call.1} parent=71 // pred_region
          %583 = dma.done [#allocation6], 256
        $region80: #{tpu_custom_call.1} parent=71 // pred_fallthru
          _
        // Predicated region
        $region81: #{tpu_custom_call.1} parent=71 // pred_check
          %p584 = pneg %p114
        $region82: #{tpu_custom_call.1} parent=71 // pred_check_branch
          %586 = sbr.rel (%p584) target = $region84
        $region83: #{tpu_custom_call.1} parent=71 // pred_region
          %587 = dma.done [#allocation6], 256
        $region84: #{tpu_custom_call.1} parent=71 // pred_fallthru
          _
        // Predicated region
        $region85: #{tpu_custom_call.1} parent=71 // pred_check
          %p588 = pneg %p156
        $region86: #{tpu_custom_call.1} parent=71 // pred_check_branch
          %590 = sbr.rel (%p588) target = $region88
        $region87: #{tpu_custom_call.1} parent=71 // pred_region
          %591 = dma.done [#allocation9], 256
        $region88: #{tpu_custom_call.1} parent=71 // pred_fallthru
          _
        %s592 = sand.u32 %s35, 1
        %s593 = scalar_lea.sflag [#allocation3], %s592
        %s594 = sand.u32 %s169, 1
        %s595 = smul.addr %s594, 64
        %s596 = scalar_lea.vmem [#allocation10], %s595
        // Predicated region
        $region89: #{tpu_custom_call.1} parent=71 // pred_check
          %p597 = pneg %p182
        $region90: #{tpu_custom_call.1} parent=71 // pred_check_branch
          %599 = sbr.rel (%p597) target = $region92
        $region91: #{tpu_custom_call.1} parent=71 // pred_region
          %600 = dma.done %s593, 1024
        $region92: #{tpu_custom_call.1} parent=71 // pred_fallthru
          _
        %s601 = sand.u32 %s35, 1
        %s602 = scalar_lea.sflag [#allocation3], %s601
        %s603 = sand.u32 %s195, 1
        %s604 = smul.addr %s603, 64
        %s605 = scalar_lea.vmem [#allocation11], %s604
        // Predicated region
        $region93: #{tpu_custom_call.1} parent=71 // pred_check
          %p606 = pneg %p208
        $region94: #{tpu_custom_call.1} parent=71 // pred_check_branch
          %608 = sbr.rel (%p606) target = $region96
        $region95: #{tpu_custom_call.1} parent=71 // pred_region
          %609 = dma.done %s602, 1024
        $region96: #{tpu_custom_call.1} parent=71 // pred_fallthru
          _
        %s610 = sand.u32 %s35, 1
        %s611 = scalar_lea.sflag [#allocation3], %s610
        %s612 = sand.u32 %s221, 1
        %s613 = smul.addr %s612, 64
        %s614 = scalar_lea.vmem [#allocation12], %s613
        // Predicated region
        $region97: #{tpu_custom_call.1} parent=71 // pred_check
          %p615 = pneg %p234
        $region98: #{tpu_custom_call.1} parent=71 // pred_check_branch
          %617 = sbr.rel (%p615) target = $region100
        $region99: #{tpu_custom_call.1} parent=71 // pred_region
          %618 = dma.done %s611, 1024
        $region100: #{tpu_custom_call.1} parent=71 // pred_fallthru
          _
        %s619 = sand.u32 %s35, 1
        %s620 = scalar_lea.sflag [#allocation3], %s619
        %s621 = sand.u32 %s247, 1
        %s622 = smul.addr %s621, 64
        %s623 = scalar_lea.vmem [#allocation13], %s622
        // Predicated region
        $region101: #{tpu_custom_call.1} parent=71 // pred_check
          %p624 = pneg %p260
        $region102: #{tpu_custom_call.1} parent=71 // pred_check_branch
          %626 = sbr.rel (%p624) target = $region104
        $region103: #{tpu_custom_call.1} parent=71 // pred_region
          %627 = dma.done %s620, 1024
        $region104: #{tpu_custom_call.1} parent=71 // pred_fallthru
          _
        %p628 = pneg %p51
        %p629 = pneg %p48
        %p630 = pneg %p72
        %p631 = pneg %p69
        %p632 = pneg %p93
        %p633 = pneg %p90
        %p634 = pneg %p114
        %p635 = pneg %p111
        %p636 = pneg %p135
        %p637 = pneg %p132
        %p638 = pneg %p156
        %p639 = pneg %p153
        %s640 = sand.u32 %s35, 1
        %s641 = scalar_lea.sflag [#allocation3], %s640
        %s642 = sand.u32 %s169, 1
        %s643 = smul.addr %s642, 64
        %s644 = scalar_lea.vmem [#allocation10], %s643
        %p645 = pneg %p182
        %p646 = pneg %p179
        %s647 = sand.u32 %s35, 1
        %s648 = scalar_lea.sflag [#allocation3], %s647
        %s649 = sand.u32 %s195, 1
        %s650 = smul.addr %s649, 64
        %s651 = scalar_lea.vmem [#allocation11], %s650
        %p652 = pneg %p208
        %p653 = pneg %p205
        %s654 = sand.u32 %s35, 1
        %s655 = scalar_lea.sflag [#allocation3], %s654
        %s656 = sand.u32 %s221, 1
        %s657 = smul.addr %s656, 64
        %s658 = scalar_lea.vmem [#allocation12], %s657
        %p659 = pneg %p234
        %p660 = pneg %p231
        %s661 = sand.u32 %s35, 1
        %s662 = scalar_lea.sflag [#allocation3], %s661
        %s663 = sand.u32 %s247, 1
        %s664 = smul.addr %s663, 64
        %s665 = scalar_lea.vmem [#allocation13], %s664
        %p666 = pneg %p260
        %p667 = pneg %p257
        %p668 = pneg %p281
        %p669 = pneg %p278
        %s670 = smul.u32 4, %s35
        %p671 = scmp.lt.s32.totalorder %s670, 7
        %s672 = scalar_select %p671, %s670, 7
        %s673 = scalar_lea.vmem %s11, %s672
        %p674 = pneg %p307
        %p675 = pneg %p304
        %s676 = smul.u32 4, %s35
        %p677 = scmp.lt.s32.totalorder %s676, 7
        %s678 = scalar_select %p677, %s676, 7
        %s679 = scalar_lea.vmem %s12, %s678
        %p680 = pneg %p333
        %p681 = pneg %p330
        %p682 = pneg %p359
        %p683 = pneg %p356
        %s684 = sand.u32 %s346, 1
        %s685 = scalar_lea.sflag [#allocation4], %s684
        %s686 = sand.u32 %s346, 1
        %s687 = smul.addr %s686, 64
        %s688 = scalar_lea.vmem [#allocation14], %s687
        %p689 = pneg %p385
        %p690 = pneg %p382
        %s691 = sand.u32 %s372, 1
        %s692 = scalar_lea.sflag [#allocation16], %s691
        %s693 = sand.u32 %s372, 1
        %s694 = smul.addr %s693, 64
        %s695 = scalar_lea.vmem [#allocation15], %s694
        %s696 = smul.u32 4, %s35
        %s697 = smul.u32 4, %s35
        %s698 = smul.u32 4, %s35
        %s699 = smul.u32 4, %s35
        %s700 = smul.u32 4, %s35
        %p701 = scmp.lt.s32.totalorder %s700, 7
        %s702 = scalar_select %p701, %s700, 7
        %s703 = scalar_lea.vmem %s11, %s702
        %s704 = smul.u32 4, %s35
        %s705 = smul.u32 4, %s35
        %p706 = scmp.lt.s32.totalorder %s705, 7
        %s707 = scalar_select %p706, %s705, 7
        %s708 = scalar_lea.vmem %s12, %s707
        %s709 = smul.u32 4, %s35
        %s710 = smul.u32 4, %s35
        %s711 = smul.u32 4, %s35
        %v712 = vld [vmem:[%s0] sm:$0xff]
        %v713 = vld [vmem:[%s0 + $0x8] sm:$0xff]
        %v714 = vld [vmem:[#allocation2] sm:$0xff]
        %v715 = vld [vmem:[#allocation2 + $0x8] sm:$0xff]
        %v716 = vld [vmem:[#allocation5] sm:$0xff]
        %v717 = vld [vmem:[#allocation5 + $0x8] sm:$0xff]
        %v718 = vld [vmem:[#allocation7] sm:$0xff]
        %v719 = vld [vmem:[#allocation7 + $0x8] sm:$0xff]
        %v720 = vld [vmem:[%s4] sm:$0xff]
        %v721 = vld [vmem:[%s4 + $0x8] sm:$0xff]
        %v722 = vld [vmem:[#allocation8] sm:$0xff]
        %v723 = vld [vmem:[#allocation8 + $0x8] sm:$0xff]
        %v724 = vld [vmem:[%s10] sm:$0xff]
        %v725 = vld [vmem:[%s10 + $0x8] sm:$0xff]
        loop: start=0, step=1, limit=4
        $region105: #{tpu_custom_call.1} parent=71 // loop_pre_header
          _
        $region106: #{tpu_custom_call.1} parent=71 // loop_header
          %s727 = sphi 0, %s731
          %p728 = scmp.ge.s32.totalorder %s727, 4
        $region107: #{tpu_custom_call.1} parent=71 // loop_header_branch
          %730 = sbr.rel (%p728) target = $region111
        $region108: #{tpu_custom_call.1} parent=71 // loop_body
          %s732 = scalar_lea.vmem %s703, %s727
          %v733 = vld [vmem:[%s732] sm:$0x1]
          %s734 = scalar_lea.vmem %s708, %s727
          %v735 = vld [vmem:[%s734] sm:$0x1]
          %v736 = vadd.f32 %v735, 1e-11
          %v737 = vrcp.pop %v736
          %v738 = vmul.f32 1.0, %v737
          %s739 = smul.u32 %s727, 16
          %s740 = scalar_lea.vmem %s596, %s739 [#allocation10]
          %v741 = vld [vmem:[%s740] sm:$0xff]
          %v742 = vld [vmem:[%s740 + $0x8] sm:$0xff]
          %v744 = vlaneseq
          %v745 = vshrl.u32 %v744, 7
          %v746 = vsub.s32 0, %v745
          %v747 = vrot.slane %v735, %v746
          %748 = vset.pattern.permute.xlu0 0
          %749 = vperm.xlu0 %748, %v747
          %v750 = vpop.permute.xlu0 %749
          %v752 = vmul.f32 %v741, %v750
          %v753 = vmul.f32 %v742, %v750
          %v755 = vlaneseq
          %v756 = vshrl.u32 %v755, 7
          %v757 = vsub.s32 0, %v756
          %v758 = vrot.slane %v733, %v757
          %759 = vset.pattern.permute.xlu0 0
          %760 = vperm.xlu0 %759, %v758
          %v761 = vpop.permute.xlu0 %760
          %v763 = vadd.f32 %v752, %v761
          %v764 = vadd.f32 %v753, %v761
          %s765 = scalar_lea.vmem %s605, %s739 [#allocation11]
          %v766 = vld [vmem:[%s765] sm:$0xff]
          %v767 = vld [vmem:[%s765 + $0x8] sm:$0xff]
          %v768 = vmul.f32 %v766, %v750
          %v769 = vmul.f32 %v767, %v750
          %vm770 = vcmask 130048
          %v772 = vsel %vm770, %v763, 0
          %v775 = vsel %vm770, %v764, 0
          %777 = vmatprep.subr.mxu0 0.0
          %778 = vmatpush1.msra.mxu0 %v722
          %779 = vmatprep.subr.mxu0 0.0
          %780 = vmatpush1.msra.mxu0 %v723
          %781 = vmatprep.subr.mxu0 0.0
          %782 = vmatpush1.msra.mxu0 0.0
          %783 = vmatprep.subr.mxu0 0.0
          %784 = vmatpush1.msra.mxu0 0.0
          %785 = vmatprep.subr.mxu0 0.0
          %786 = vmatpush1.msra.mxu0 0.0
          %787 = vmatprep.subr.mxu0 0.0
          %788 = vmatpush1.msra.mxu0 0.0
          %789 = vmatprep.subr.mxu0 0.0
          %790 = vmatpush1.msra.mxu0 0.0
          %791 = vmatprep.subr.mxu0 0.0
          %792 = vmatpush1.msra.mxu0 0.0
          %793 = vmatprep.subr.mxu0 0.0
          %794 = vmatpush1.msra.mxu0 0.0
          %795 = vmatprep.subr.mxu0 0.0
          %796 = vmatpush1.msra.mxu0 0.0
          %797 = vmatprep.subr.mxu0 0.0
          %798 = vmatpush1.msra.mxu0 0.0
          %799 = vmatprep.subr.mxu0 0.0
          %800 = vmatpush1.msra.mxu0 0.0
          %801 = vmatprep.subr.mxu0 0.0
          %802 = vmatpush1.msra.mxu0 0.0
          %803 = vmatprep.subr.mxu0 0.0
          %804 = vmatpush1.msra.mxu0 0.0
          %805 = vmatprep.subr.mxu0 0.0
          %806 = vmatpush1.msra.mxu0 0.0
          %807 = vmatprep.subr.mxu0 0.0
          %808 = vmatpush1.msra.mxu0 0.0
          %809 = vmatprep.subr.mxu0 0.0
          %810 = vmatpush1.msra.mxu0 0.0
          %811 = vmatprep.subr.mxu0 0.0
          %812 = vmatpush1.msra.mxu0 0.0
          %813 = vmatprep.subr.mxu0 0.0
          %814 = vmatpush1.msra.mxu0 0.0
          %815 = vmatprep.subr.mxu0 0.0
          %816 = vmatpush1.msra.mxu0 0.0
          %817 = vmatprep.subr.mxu0 0.0
          %818 = vmatpush1.msra.mxu0 0.0
          %819 = vmatprep.subr.mxu0 0.0
          %820 = vmatpush1.msra.mxu0 0.0
          %821 = vmatprep.subr.mxu0 0.0
          %822 = vmatpush1.msra.mxu0 0.0
          %823 = vmatprep.subr.mxu0 0.0
          %824 = vmatpush1.msra.mxu0 0.0
          %825 = vmatprep.subr.mxu0 0.0
          %826 = vmatpush1.msra.mxu0 0.0
          %827 = vmatprep.subr.mxu0 0.0
          %828 = vmatpush1.msra.mxu0 0.0
          %829 = vmatprep.subr.mxu0 0.0
          %830 = vmatpush1.msra.mxu0 0.0
          %831 = vmatprep.subr.mxu0 0.0
          %832 = vmatpush1.msra.mxu0 0.0
          %833 = vmatprep.subr.mxu0 0.0
          %834 = vmatpush1.msra.mxu0 0.0
          %835 = vmatprep.subr.mxu0 0.0
          %836 = vmatpush1.msra.mxu0 0.0
          %837 = vmatprep.subr.mxu0 0.0
          %838 = vmatpush1.msra.mxu0 0.0
          %839 = vmatprep.subr.mxu0 0.0
          %840 = vmatpush1.msra.mxu0 0.0
          %841 = vmatprep.mubr.f32.mxu0 0.0
          %842 = vmatmul.mubr.f32.gmra.mrb[0].mxu0 %v772
          %v843 = vpop.f32.mrb[0].mxu0
          %v844 = vadd.f32 0.0, %v843
          %v845 = vpop.f32.mrb[0].mxu0
          %846 = vmatprep.mubr.f32.mxu0 0.0
          %847 = vmatmul.mubr.f32.gmra.mrb[0].mxu0 %v775
          %v848 = vpop.f32.mrb[0].mxu0
          %v849 = vadd.f32 0.0, %v848
          %v850 = vpop.f32.mrb[0].mxu0
          %851 = vdwg.mxu0
          %v852 = vadd.f32 %v763, %v768
          %v853 = vadd.f32 %v764, %v769
          %v855 = vsel %vm770, %v852, 0
          %v858 = vsel %vm770, %v853, 0
          %860 = vmatprep.subr.mxu0 0.0
          %861 = vmatpush1.msra.mxu0 %v720
          %862 = vmatprep.subr.mxu0 0.0
          %863 = vmatpush1.msra.mxu0 %v721
          %864 = vmatprep.subr.mxu0 0.0
          %865 = vmatpush1.msra.mxu0 0.0
          %866 = vmatprep.subr.mxu0 0.0
          %867 = vmatpush1.msra.mxu0 0.0
          %868 = vmatprep.subr.mxu0 0.0
          %869 = vmatpush1.msra.mxu0 0.0
          %870 = vmatprep.subr.mxu0 0.0
          %871 = vmatpush1.msra.mxu0 0.0
          %872 = vmatprep.subr.mxu0 0.0
          %873 = vmatpush1.msra.mxu0 0.0
          %874 = vmatprep.subr.mxu0 0.0
          %875 = vmatpush1.msra.mxu0 0.0
          %876 = vmatprep.subr.mxu0 0.0
          %877 = vmatpush1.msra.mxu0 0.0
          %878 = vmatprep.subr.mxu0 0.0
          %879 = vmatpush1.msra.mxu0 0.0
          %880 = vmatprep.subr.mxu0 0.0
          %881 = vmatpush1.msra.mxu0 0.0
          %882 = vmatprep.subr.mxu0 0.0
          %883 = vmatpush1.msra.mxu0 0.0
          %884 = vmatprep.subr.mxu0 0.0
          %885 = vmatpush1.msra.mxu0 0.0
          %886 = vmatprep.subr.mxu0 0.0
          %887 = vmatpush1.msra.mxu0 0.0
          %888 = vmatprep.subr.mxu0 0.0
          %889 = vmatpush1.msra.mxu0 0.0
          %890 = vmatprep.subr.mxu0 0.0
          %891 = vmatpush1.msra.mxu0 0.0
          %892 = vmatprep.subr.mxu0 0.0
          %893 = vmatpush1.msra.mxu0 0.0
          %894 = vmatprep.subr.mxu0 0.0
          %895 = vmatpush1.msra.mxu0 0.0
          %896 = vmatprep.subr.mxu0 0.0
          %897 = vmatpush1.msra.mxu0 0.0
          %898 = vmatprep.subr.mxu0 0.0
          %899 = vmatpush1.msra.mxu0 0.0
          %900 = vmatprep.subr.mxu0 0.0
          %901 = vmatpush1.msra.mxu0 0.0
          %902 = vmatprep.subr.mxu0 0.0
          %903 = vmatpush1.msra.mxu0 0.0
          %904 = vmatprep.subr.mxu0 0.0
          %905 = vmatpush1.msra.mxu0 0.0
          %906 = vmatprep.subr.mxu0 0.0
          %907 = vmatpush1.msra.mxu0 0.0
          %908 = vmatprep.subr.mxu0 0.0
          %909 = vmatpush1.msra.mxu0 0.0
          %910 = vmatprep.subr.mxu0 0.0
          %911 = vmatpush1.msra.mxu0 0.0
          %912 = vmatprep.subr.mxu0 0.0
          %913 = vmatpush1.msra.mxu0 0.0
          %914 = vmatprep.subr.mxu0 0.0
          %915 = vmatpush1.msra.mxu0 0.0
          %916 = vmatprep.subr.mxu0 0.0
          %917 = vmatpush1.msra.mxu0 0.0
          %918 = vmatprep.subr.mxu0 0.0
          %919 = vmatpush1.msra.mxu0 0.0
          %920 = vmatprep.subr.mxu0 0.0
          %921 = vmatpush1.msra.mxu0 0.0
          %922 = vmatprep.subr.mxu0 0.0
          %923 = vmatpush1.msra.mxu0 0.0
          %924 = vmatprep.mubr.f32.mxu0 0.0
          %925 = vmatmul.mubr.f32.gmra.mrb[0].mxu0 %v855
          %v926 = vpop.f32.mrb[0].mxu0
          %v927 = vadd.f32 0.0, %v926
          %v928 = vpop.f32.mrb[0].mxu0
          %929 = vmatprep.mubr.f32.mxu0 0.0
          %930 = vmatmul.mubr.f32.gmra.mrb[0].mxu0 %v858
          %v931 = vpop.f32.mrb[0].mxu0
          %v932 = vadd.f32 0.0, %v931
          %v933 = vpop.f32.mrb[0].mxu0
          %934 = vdwg.mxu0
          %v935 = vsub.f32 %v844, %v927
          %v936 = vsub.f32 %v849, %v932
          %v937 = vsub.f32 %v768, %v763
          %v938 = vsub.f32 %v769, %v764
          %v940 = vsel %vm770, %v937, 0
          %v943 = vsel %vm770, %v938, 0
          %945 = vmatprep.subr.mxu0 0.0
          %946 = vmatpush1.msra.mxu0 %v718
          %947 = vmatprep.subr.mxu0 0.0
          %948 = vmatpush1.msra.mxu0 %v719
          %949 = vmatprep.subr.mxu0 0.0
          %950 = vmatpush1.msra.mxu0 0.0
          %951 = vmatprep.subr.mxu0 0.0
          %952 = vmatpush1.msra.mxu0 0.0
          %953 = vmatprep.subr.mxu0 0.0
          %954 = vmatpush1.msra.mxu0 0.0
          %955 = vmatprep.subr.mxu0 0.0
          %956 = vmatpush1.msra.mxu0 0.0
          %957 = vmatprep.subr.mxu0 0.0
          %958 = vmatpush1.msra.mxu0 0.0
          %959 = vmatprep.subr.mxu0 0.0
          %960 = vmatpush1.msra.mxu0 0.0
          %961 = vmatprep.subr.mxu0 0.0
          %962 = vmatpush1.msra.mxu0 0.0
          %963 = vmatprep.subr.mxu0 0.0
          %964 = vmatpush1.msra.mxu0 0.0
          %965 = vmatprep.subr.mxu0 0.0
          %966 = vmatpush1.msra.mxu0 0.0
          %967 = vmatprep.subr.mxu0 0.0
          %968 = vmatpush1.msra.mxu0 0.0
          %969 = vmatprep.subr.mxu0 0.0
          %970 = vmatpush1.msra.mxu0 0.0
          %971 = vmatprep.subr.mxu0 0.0
          %972 = vmatpush1.msra.mxu0 0.0
          %973 = vmatprep.subr.mxu0 0.0
          %974 = vmatpush1.msra.mxu0 0.0
          %975 = vmatprep.subr.mxu0 0.0
          %976 = vmatpush1.msra.mxu0 0.0
          %977 = vmatprep.subr.mxu0 0.0
          %978 = vmatpush1.msra.mxu0 0.0
          %979 = vmatprep.subr.mxu0 0.0
          %980 = vmatpush1.msra.mxu0 0.0
          %981 = vmatprep.subr.mxu0 0.0
          %982 = vmatpush1.msra.mxu0 0.0
          %983 = vmatprep.subr.mxu0 0.0
          %984 = vmatpush1.msra.mxu0 0.0
          %985 = vmatprep.subr.mxu0 0.0
          %986 = vmatpush1.msra.mxu0 0.0
          %987 = vmatprep.subr.mxu0 0.0
          %988 = vmatpush1.msra.mxu0 0.0
          %989 = vmatprep.subr.mxu0 0.0
          %990 = vmatpush1.msra.mxu0 0.0
          %991 = vmatprep.subr.mxu0 0.0
          %992 = vmatpush1.msra.mxu0 0.0
          %993 = vmatprep.subr.mxu0 0.0
          %994 = vmatpush1.msra.mxu0 0.0
          %995 = vmatprep.subr.mxu0 0.0
          %996 = vmatpush1.msra.mxu0 0.0
          %997 = vmatprep.subr.mxu0 0.0
          %998 = vmatpush1.msra.mxu0 0.0
          %999 = vmatprep.subr.mxu0 0.0
          %1000 = vmatpush1.msra.mxu0 0.0
          %1001 = vmatprep.subr.mxu0 0.0
          %1002 = vmatpush1.msra.mxu0 0.0
          %1003 = vmatprep.subr.mxu0 0.0
          %1004 = vmatpush1.msra.mxu0 0.0
          %1005 = vmatprep.subr.mxu0 0.0
          %1006 = vmatpush1.msra.mxu0 0.0
          %1007 = vmatprep.subr.mxu0 0.0
          %1008 = vmatpush1.msra.mxu0 0.0
          %1009 = vmatprep.mubr.f32.mxu0 0.0
          %1010 = vmatmul.mubr.f32.gmra.mrb[0].mxu0 %v940
          %v1011 = vpop.f32.mrb[0].mxu0
          %v1012 = vadd.f32 0.0, %v1011
          %v1013 = vpop.f32.mrb[0].mxu0
          %1014 = vmatprep.mubr.f32.mxu0 0.0
          %1015 = vmatmul.mubr.f32.gmra.mrb[0].mxu0 %v943
          %v1016 = vpop.f32.mrb[0].mxu0
          %v1017 = vadd.f32 0.0, %v1016
          %v1018 = vpop.f32.mrb[0].mxu0
          %1019 = vdwg.mxu0
          %v1020 = vadd.f32 %v844, %v1012
          %v1021 = vadd.f32 %v849, %v1017
          %v1022 = vadd.f32 %v935, %v1020
          %v1023 = vadd.f32 %v936, %v1021
          %v1025 = vsel %vm770, %v712, 0
          %v1028 = vsel %vm770, %v713, 0
          %1030 = vmatprep.subr.mxu0 0.0
          %1031 = vmatpush1.msra.mxu0 %v1022
          %1032 = vmatprep.subr.mxu0 0.0
          %1033 = vmatpush1.msra.mxu0 %v1023
          %1034 = vmatprep.subr.mxu0 0.0
          %1035 = vmatpush1.msra.mxu0 0.0
          %1036 = vmatprep.subr.mxu0 0.0
          %1037 = vmatpush1.msra.mxu0 0.0
          %1038 = vmatprep.subr.mxu0 0.0
          %1039 = vmatpush1.msra.mxu0 0.0
          %1040 = vmatprep.subr.mxu0 0.0
          %1041 = vmatpush1.msra.mxu0 0.0
          %1042 = vmatprep.subr.mxu0 0.0
          %1043 = vmatpush1.msra.mxu0 0.0
          %1044 = vmatprep.subr.mxu0 0.0
          %1045 = vmatpush1.msra.mxu0 0.0
          %1046 = vmatprep.subr.mxu0 0.0
          %1047 = vmatpush1.msra.mxu0 0.0
          %1048 = vmatprep.subr.mxu0 0.0
          %1049 = vmatpush1.msra.mxu0 0.0
          %1050 = vmatprep.subr.mxu0 0.0
          %1051 = vmatpush1.msra.mxu0 0.0
          %1052 = vmatprep.subr.mxu0 0.0
          %1053 = vmatpush1.msra.mxu0 0.0
          %1054 = vmatprep.subr.mxu0 0.0
          %1055 = vmatpush1.msra.mxu0 0.0
          %1056 = vmatprep.subr.mxu0 0.0
          %1057 = vmatpush1.msra.mxu0 0.0
          %1058 = vmatprep.subr.mxu0 0.0
          %1059 = vmatpush1.msra.mxu0 0.0
          %1060 = vmatprep.subr.mxu0 0.0
          %1061 = vmatpush1.msra.mxu0 0.0
          %1062 = vmatprep.subr.mxu0 0.0
          %1063 = vmatpush1.msra.mxu0 0.0
          %1064 = vmatprep.subr.mxu0 0.0
          %1065 = vmatpush1.msra.mxu0 0.0
          %1066 = vmatprep.subr.mxu0 0.0
          %1067 = vmatpush1.msra.mxu0 0.0
          %1068 = vmatprep.subr.mxu0 0.0
          %1069 = vmatpush1.msra.mxu0 0.0
          %1070 = vmatprep.subr.mxu0 0.0
          %1071 = vmatpush1.msra.mxu0 0.0
          %1072 = vmatprep.subr.mxu0 0.0
          %1073 = vmatpush1.msra.mxu0 0.0
          %1074 = vmatprep.subr.mxu0 0.0
          %1075 = vmatpush1.msra.mxu0 0.0
          %1076 = vmatprep.subr.mxu0 0.0
          %1077 = vmatpush1.msra.mxu0 0.0
          %1078 = vmatprep.subr.mxu0 0.0
          %1079 = vmatpush1.msra.mxu0 0.0
          %1080 = vmatprep.subr.mxu0 0.0
          %1081 = vmatpush1.msra.mxu0 0.0
          %1082 = vmatprep.subr.mxu0 0.0
          %1083 = vmatpush1.msra.mxu0 0.0
          %1084 = vmatprep.subr.mxu0 0.0
          %1085 = vmatpush1.msra.mxu0 0.0
          %1086 = vmatprep.subr.mxu0 0.0
          %1087 = vmatpush1.msra.mxu0 0.0
          %1088 = vmatprep.subr.mxu0 0.0
          %1089 = vmatpush1.msra.mxu0 0.0
          %1090 = vmatprep.subr.mxu0 0.0
          %1091 = vmatpush1.msra.mxu0 0.0
          %1092 = vmatprep.subr.mxu0 0.0
          %1093 = vmatpush1.msra.mxu0 0.0
          %1094 = vmatprep.mubr.f32.mxu0 0.0
          %1095 = vmatmul.mubr.f32.gmra.mrb[0].mxu0 %v1025
          %v1096 = vpop.f32.mrb[0].mxu0
          %v1097 = vadd.f32 0.0, %v1096
          %v1098 = vpop.f32.mrb[0].mxu0
          %1099 = vmatprep.mubr.f32.mxu0 0.0
          %1100 = vmatmul.mubr.f32.gmra.mrb[0].mxu0 %v1028
          %v1101 = vpop.f32.mrb[0].mxu0
          %v1102 = vadd.f32 0.0, %v1101
          %v1103 = vpop.f32.mrb[0].mxu0
          %1104 = vdwg.mxu0
          %v1106 = vsel %vm770, %v714, 0
          %v1109 = vsel %vm770, %v715, 0
          %1111 = vmatprep.subr.mxu0 0.0
          %1112 = vmatpush1.msra.mxu0 %v1020
          %1113 = vmatprep.subr.mxu0 0.0
          %1114 = vmatpush1.msra.mxu0 %v1021
          %1115 = vmatprep.subr.mxu0 0.0
          %1116 = vmatpush1.msra.mxu0 0.0
          %1117 = vmatprep.subr.mxu0 0.0
          %1118 = vmatpush1.msra.mxu0 0.0
          %1119 = vmatprep.subr.mxu0 0.0
          %1120 = vmatpush1.msra.mxu0 0.0
          %1121 = vmatprep.subr.mxu0 0.0
          %1122 = vmatpush1.msra.mxu0 0.0
          %1123 = vmatprep.subr.mxu0 0.0
          %1124 = vmatpush1.msra.mxu0 0.0
          %1125 = vmatprep.subr.mxu0 0.0
          %1126 = vmatpush1.msra.mxu0 0.0
          %1127 = vmatprep.subr.mxu0 0.0
          %1128 = vmatpush1.msra.mxu0 0.0
          %1129 = vmatprep.subr.mxu0 0.0
          %1130 = vmatpush1.msra.mxu0 0.0
          %1131 = vmatprep.subr.mxu0 0.0
          %1132 = vmatpush1.msra.mxu0 0.0
          %1133 = vmatprep.subr.mxu0 0.0
          %1134 = vmatpush1.msra.mxu0 0.0
          %1135 = vmatprep.subr.mxu0 0.0
          %1136 = vmatpush1.msra.mxu0 0.0
          %1137 = vmatprep.subr.mxu0 0.0
          %1138 = vmatpush1.msra.mxu0 0.0
          %1139 = vmatprep.subr.mxu0 0.0
          %1140 = vmatpush1.msra.mxu0 0.0
          %1141 = vmatprep.subr.mxu0 0.0
          %1142 = vmatpush1.msra.mxu0 0.0
          %1143 = vmatprep.subr.mxu0 0.0
          %1144 = vmatpush1.msra.mxu0 0.0
          %1145 = vmatprep.subr.mxu0 0.0
          %1146 = vmatpush1.msra.mxu0 0.0
          %1147 = vmatprep.subr.mxu0 0.0
          %1148 = vmatpush1.msra.mxu0 0.0
          %1149 = vmatprep.subr.mxu0 0.0
          %1150 = vmatpush1.msra.mxu0 0.0
          %1151 = vmatprep.subr.mxu0 0.0
          %1152 = vmatpush1.msra.mxu0 0.0
          %1153 = vmatprep.subr.mxu0 0.0
          %1154 = vmatpush1.msra.mxu0 0.0
          %1155 = vmatprep.subr.mxu0 0.0
          %1156 = vmatpush1.msra.mxu0 0.0
          %1157 = vmatprep.subr.mxu0 0.0
          %1158 = vmatpush1.msra.mxu0 0.0
          %1159 = vmatprep.subr.mxu0 0.0
          %1160 = vmatpush1.msra.mxu0 0.0
          %1161 = vmatprep.subr.mxu0 0.0
          %1162 = vmatpush1.msra.mxu0 0.0
          %1163 = vmatprep.subr.mxu0 0.0
          %1164 = vmatpush1.msra.mxu0 0.0
          %1165 = vmatprep.subr.mxu0 0.0
          %1166 = vmatpush1.msra.mxu0 0.0
          %1167 = vmatprep.subr.mxu0 0.0
          %1168 = vmatpush1.msra.mxu0 0.0
          %1169 = vmatprep.subr.mxu0 0.0
          %1170 = vmatpush1.msra.mxu0 0.0
          %1171 = vmatprep.subr.mxu0 0.0
          %1172 = vmatpush1.msra.mxu0 0.0
          %1173 = vmatprep.subr.mxu0 0.0
          %1174 = vmatpush1.msra.mxu0 0.0
          %1175 = vmatprep.mubr.f32.mxu0 0.0
          %1176 = vmatmul.mubr.f32.gmra.mrb[0].mxu0 %v1106
          %v1177 = vpop.f32.mrb[0].mxu0
          %v1178 = vadd.f32 0.0, %v1177
          %v1179 = vpop.f32.mrb[0].mxu0
          %1180 = vmatprep.mubr.f32.mxu0 0.0
          %1181 = vmatmul.mubr.f32.gmra.mrb[0].mxu0 %v1109
          %v1182 = vpop.f32.mrb[0].mxu0
          %v1183 = vadd.f32 0.0, %v1182
          %v1184 = vpop.f32.mrb[0].mxu0
          %1185 = vdwg.mxu0
          %v1186 = vsub.f32 %v1097, %v1178
          %v1187 = vsub.f32 %v1102, %v1183
          %v1189 = vsel %vm770, %v716, 0
          %v1192 = vsel %vm770, %v717, 0
          %1194 = vmatprep.subr.mxu0 0.0
          %1195 = vmatpush1.msra.mxu0 %v935
          %1196 = vmatprep.subr.mxu0 0.0
          %1197 = vmatpush1.msra.mxu0 %v936
          %1198 = vmatprep.subr.mxu0 0.0
          %1199 = vmatpush1.msra.mxu0 0.0
          %1200 = vmatprep.subr.mxu0 0.0
          %1201 = vmatpush1.msra.mxu0 0.0
          %1202 = vmatprep.subr.mxu0 0.0
          %1203 = vmatpush1.msra.mxu0 0.0
          %1204 = vmatprep.subr.mxu0 0.0
          %1205 = vmatpush1.msra.mxu0 0.0
          %1206 = vmatprep.subr.mxu0 0.0
          %1207 = vmatpush1.msra.mxu0 0.0
          %1208 = vmatprep.subr.mxu0 0.0
          %1209 = vmatpush1.msra.mxu0 0.0
          %1210 = vmatprep.subr.mxu0 0.0
          %1211 = vmatpush1.msra.mxu0 0.0
          %1212 = vmatprep.subr.mxu0 0.0
          %1213 = vmatpush1.msra.mxu0 0.0
          %1214 = vmatprep.subr.mxu0 0.0
          %1215 = vmatpush1.msra.mxu0 0.0
          %1216 = vmatprep.subr.mxu0 0.0
          %1217 = vmatpush1.msra.mxu0 0.0
          %1218 = vmatprep.subr.mxu0 0.0
          %1219 = vmatpush1.msra.mxu0 0.0
          %1220 = vmatprep.subr.mxu0 0.0
          %1221 = vmatpush1.msra.mxu0 0.0
          %1222 = vmatprep.subr.mxu0 0.0
          %1223 = vmatpush1.msra.mxu0 0.0
          %1224 = vmatprep.subr.mxu0 0.0
          %1225 = vmatpush1.msra.mxu0 0.0
          %1226 = vmatprep.subr.mxu0 0.0
          %1227 = vmatpush1.msra.mxu0 0.0
          %1228 = vmatprep.subr.mxu0 0.0
          %1229 = vmatpush1.msra.mxu0 0.0
          %1230 = vmatprep.subr.mxu0 0.0
          %1231 = vmatpush1.msra.mxu0 0.0
          %1232 = vmatprep.subr.mxu0 0.0
          %1233 = vmatpush1.msra.mxu0 0.0
          %1234 = vmatprep.subr.mxu0 0.0
          %1235 = vmatpush1.msra.mxu0 0.0
          %1236 = vmatprep.subr.mxu0 0.0
          %1237 = vmatpush1.msra.mxu0 0.0
          %1238 = vmatprep.subr.mxu0 0.0
          %1239 = vmatpush1.msra.mxu0 0.0
          %1240 = vmatprep.subr.mxu0 0.0
          %1241 = vmatpush1.msra.mxu0 0.0
          %1242 = vmatprep.subr.mxu0 0.0
          %1243 = vmatpush1.msra.mxu0 0.0
          %1244 = vmatprep.subr.mxu0 0.0
          %1245 = vmatpush1.msra.mxu0 0.0
          %1246 = vmatprep.subr.mxu0 0.0
          %1247 = vmatpush1.msra.mxu0 0.0
          %1248 = vmatprep.subr.mxu0 0.0
          %1249 = vmatpush1.msra.mxu0 0.0
          %1250 = vmatprep.subr.mxu0 0.0
          %1251 = vmatpush1.msra.mxu0 0.0
          %1252 = vmatprep.subr.mxu0 0.0
          %1253 = vmatpush1.msra.mxu0 0.0
          %1254 = vmatprep.subr.mxu0 0.0
          %1255 = vmatpush1.msra.mxu0 0.0
          %1256 = vmatprep.subr.mxu0 0.0
          %1257 = vmatpush1.msra.mxu0 0.0
          %1258 = vmatprep.mubr.f32.mxu0 0.0
          %1259 = vmatmul.mubr.f32.gmra.mrb[0].mxu0 %v1189
          %v1260 = vpop.f32.mrb[0].mxu0
          %v1261 = vadd.f32 0.0, %v1260
          %v1262 = vpop.f32.mrb[0].mxu0
          %1263 = vmatprep.mubr.f32.mxu0 0.0
          %1264 = vmatmul.mubr.f32.gmra.mrb[0].mxu0 %v1192
          %v1265 = vpop.f32.mrb[0].mxu0
          %v1266 = vadd.f32 0.0, %v1265
          %v1267 = vpop.f32.mrb[0].mxu0
          %1268 = vdwg.mxu0
          %v1269 = vadd.f32 %v1097, %v1261
          %v1270 = vadd.f32 %v1102, %v1266
          %s1271 = scalar_lea.vmem %s614, %s739 [#allocation12]
          %v1272 = vld [vmem:[%s1271] sm:$0xff]
          %v1273 = vld [vmem:[%s1271 + $0x8] sm:$0xff]
          %v1274 = vsub.f32 %v1272, %v1186
          %v1275 = vsub.f32 %v1273, %v1187
          %v1276 = vmul.f32 %v724, %v1274
          %v1277 = vmul.f32 %v725, %v1275
          %v1278 = vadd.f32 %v1186, %v1276
          %v1279 = vadd.f32 %v1187, %v1277
          %s1280 = scalar_lea.vmem %s623, %s739 [#allocation13]
          %v1281 = vld [vmem:[%s1280] sm:$0xff]
          %v1282 = vld [vmem:[%s1280 + $0x8] sm:$0xff]
          %v1283 = vsub.f32 %v1281, %v1269
          %v1284 = vsub.f32 %v1282, %v1270
          %v1285 = vmul.f32 %v724, %v1283
          %v1286 = vmul.f32 %v725, %v1284
          %v1287 = vadd.f32 %v1269, %v1285
          %v1288 = vadd.f32 %v1270, %v1286
          %v1290 = vsel %vm770, %v1278, 0
          %v1293 = vsel %vm770, %v1279, 0
          %1295 = vmatprep.subr.mxu0 0.0
          %1296 = vmatpush1.msra.mxu0 %v722
          %1297 = vmatprep.subr.mxu0 0.0
          %1298 = vmatpush1.msra.mxu0 %v723
          %1299 = vmatprep.subr.mxu0 0.0
          %1300 = vmatpush1.msra.mxu0 0.0
          %1301 = vmatprep.subr.mxu0 0.0
          %1302 = vmatpush1.msra.mxu0 0.0
          %1303 = vmatprep.subr.mxu0 0.0
          %1304 = vmatpush1.msra.mxu0 0.0
          %1305 = vmatprep.subr.mxu0 0.0
          %1306 = vmatpush1.msra.mxu0 0.0
          %1307 = vmatprep.subr.mxu0 0.0
          %1308 = vmatpush1.msra.mxu0 0.0
          %1309 = vmatprep.subr.mxu0 0.0
          %1310 = vmatpush1.msra.mxu0 0.0
          %1311 = vmatprep.subr.mxu0 0.0
          %1312 = vmatpush1.msra.mxu0 0.0
          %1313 = vmatprep.subr.mxu0 0.0
          %1314 = vmatpush1.msra.mxu0 0.0
          %1315 = vmatprep.subr.mxu0 0.0
          %1316 = vmatpush1.msra.mxu0 0.0
          %1317 = vmatprep.subr.mxu0 0.0
          %1318 = vmatpush1.msra.mxu0 0.0
          %1319 = vmatprep.subr.mxu0 0.0
          %1320 = vmatpush1.msra.mxu0 0.0
          %1321 = vmatprep.subr.mxu0 0.0
          %1322 = vmatpush1.msra.mxu0 0.0
          %1323 = vmatprep.subr.mxu0 0.0
          %1324 = vmatpush1.msra.mxu0 0.0
          %1325 = vmatprep.subr.mxu0 0.0
          %1326 = vmatpush1.msra.mxu0 0.0
          %1327 = vmatprep.subr.mxu0 0.0
          %1328 = vmatpush1.msra.mxu0 0.0
          %1329 = vmatprep.subr.mxu0 0.0
          %1330 = vmatpush1.msra.mxu0 0.0
          %1331 = vmatprep.subr.mxu0 0.0
          %1332 = vmatpush1.msra.mxu0 0.0
          %1333 = vmatprep.subr.mxu0 0.0
          %1334 = vmatpush1.msra.mxu0 0.0
          %1335 = vmatprep.subr.mxu0 0.0
          %1336 = vmatpush1.msra.mxu0 0.0
          %1337 = vmatprep.subr.mxu0 0.0
          %1338 = vmatpush1.msra.mxu0 0.0
          %1339 = vmatprep.subr.mxu0 0.0
          %1340 = vmatpush1.msra.mxu0 0.0
          %1341 = vmatprep.subr.mxu0 0.0
          %1342 = vmatpush1.msra.mxu0 0.0
          %1343 = vmatprep.subr.mxu0 0.0
          %1344 = vmatpush1.msra.mxu0 0.0
          %1345 = vmatprep.subr.mxu0 0.0
          %1346 = vmatpush1.msra.mxu0 0.0
          %1347 = vmatprep.subr.mxu0 0.0
          %1348 = vmatpush1.msra.mxu0 0.0
          %1349 = vmatprep.subr.mxu0 0.0
          %1350 = vmatpush1.msra.mxu0 0.0
          %1351 = vmatprep.subr.mxu0 0.0
          %1352 = vmatpush1.msra.mxu0 0.0
          %1353 = vmatprep.subr.mxu0 0.0
          %1354 = vmatpush1.msra.mxu0 0.0
          %1355 = vmatprep.subr.mxu0 0.0
          %1356 = vmatpush1.msra.mxu0 0.0
          %1357 = vmatprep.subr.mxu0 0.0
          %1358 = vmatpush1.msra.mxu0 0.0
          %1359 = vmatprep.mubr.f32.mxu0 0.0
          %1360 = vmatmul.mubr.f32.gmra.mrb[0].mxu0 %v1290
          %v1361 = vpop.f32.mrb[0].mxu0
          %v1362 = vadd.f32 0.0, %v1361
          %v1363 = vpop.f32.mrb[0].mxu0
          %1364 = vmatprep.mubr.f32.mxu0 0.0
          %1365 = vmatmul.mubr.f32.gmra.mrb[0].mxu0 %v1293
          %v1366 = vpop.f32.mrb[0].mxu0
          %v1367 = vadd.f32 0.0, %v1366
          %v1368 = vpop.f32.mrb[0].mxu0
          %1369 = vdwg.mxu0
          %v1370 = vsub.f32 %v1278, %v1287
          %v1371 = vsub.f32 %v1279, %v1288
          %v1373 = vsel %vm770, %v1370, 0
          %v1376 = vsel %vm770, %v1371, 0
          %1378 = vmatprep.subr.mxu0 0.0
          %1379 = vmatpush1.msra.mxu0 %v720
          %1380 = vmatprep.subr.mxu0 0.0
          %1381 = vmatpush1.msra.mxu0 %v721
          %1382 = vmatprep.subr.mxu0 0.0
          %1383 = vmatpush1.msra.mxu0 0.0
          %1384 = vmatprep.subr.mxu0 0.0
          %1385 = vmatpush1.msra.mxu0 0.0
          %1386 = vmatprep.subr.mxu0 0.0
          %1387 = vmatpush1.msra.mxu0 0.0
          %1388 = vmatprep.subr.mxu0 0.0
          %1389 = vmatpush1.msra.mxu0 0.0
          %1390 = vmatprep.subr.mxu0 0.0
          %1391 = vmatpush1.msra.mxu0 0.0
          %1392 = vmatprep.subr.mxu0 0.0
          %1393 = vmatpush1.msra.mxu0 0.0
          %1394 = vmatprep.subr.mxu0 0.0
          %1395 = vmatpush1.msra.mxu0 0.0
          %1396 = vmatprep.subr.mxu0 0.0
          %1397 = vmatpush1.msra.mxu0 0.0
          %1398 = vmatprep.subr.mxu0 0.0
          %1399 = vmatpush1.msra.mxu0 0.0
          %1400 = vmatprep.subr.mxu0 0.0
          %1401 = vmatpush1.msra.mxu0 0.0
          %1402 = vmatprep.subr.mxu0 0.0
          %1403 = vmatpush1.msra.mxu0 0.0
          %1404 = vmatprep.subr.mxu0 0.0
          %1405 = vmatpush1.msra.mxu0 0.0
          %1406 = vmatprep.subr.mxu0 0.0
          %1407 = vmatpush1.msra.mxu0 0.0
          %1408 = vmatprep.subr.mxu0 0.0
          %1409 = vmatpush1.msra.mxu0 0.0
          %1410 = vmatprep.subr.mxu0 0.0
          %1411 = vmatpush1.msra.mxu0 0.0
          %1412 = vmatprep.subr.mxu0 0.0
          %1413 = vmatpush1.msra.mxu0 0.0
          %1414 = vmatprep.subr.mxu0 0.0
          %1415 = vmatpush1.msra.mxu0 0.0
          %1416 = vmatprep.subr.mxu0 0.0
          %1417 = vmatpush1.msra.mxu0 0.0
          %1418 = vmatprep.subr.mxu0 0.0
          %1419 = vmatpush1.msra.mxu0 0.0
          %1420 = vmatprep.subr.mxu0 0.0
          %1421 = vmatpush1.msra.mxu0 0.0
          %1422 = vmatprep.subr.mxu0 0.0
          %1423 = vmatpush1.msra.mxu0 0.0
          %1424 = vmatprep.subr.mxu0 0.0
          %1425 = vmatpush1.msra.mxu0 0.0
          %1426 = vmatprep.subr.mxu0 0.0
          %1427 = vmatpush1.msra.mxu0 0.0
          %1428 = vmatprep.subr.mxu0 0.0
          %1429 = vmatpush1.msra.mxu0 0.0
          %1430 = vmatprep.subr.mxu0 0.0
          %1431 = vmatpush1.msra.mxu0 0.0
          %1432 = vmatprep.subr.mxu0 0.0
          %1433 = vmatpush1.msra.mxu0 0.0
          %1434 = vmatprep.subr.mxu0 0.0
          %1435 = vmatpush1.msra.mxu0 0.0
          %1436 = vmatprep.subr.mxu0 0.0
          %1437 = vmatpush1.msra.mxu0 0.0
          %1438 = vmatprep.subr.mxu0 0.0
          %1439 = vmatpush1.msra.mxu0 0.0
          %1440 = vmatprep.subr.mxu0 0.0
          %1441 = vmatpush1.msra.mxu0 0.0
          %1442 = vmatprep.mubr.f32.mxu0 0.0
          %1443 = vmatmul.mubr.f32.gmra.mrb[0].mxu0 %v1373
          %v1444 = vpop.f32.mrb[0].mxu0
          %v1445 = vadd.f32 0.0, %v1444
          %v1446 = vpop.f32.mrb[0].mxu0
          %1447 = vmatprep.mubr.f32.mxu0 0.0
          %1448 = vmatmul.mubr.f32.gmra.mrb[0].mxu0 %v1376
          %v1449 = vpop.f32.mrb[0].mxu0
          %v1450 = vadd.f32 0.0, %v1449
          %v1451 = vpop.f32.mrb[0].mxu0
          %1452 = vdwg.mxu0
          %v1453 = vsub.f32 %v1362, %v1445
          %v1454 = vsub.f32 %v1367, %v1450
          %v1455 = vadd.f32 %v1278, %v1287
          %v1456 = vadd.f32 %v1279, %v1288
          %v1458 = vsel %vm770, %v1455, 0
          %v1461 = vsel %vm770, %v1456, 0
          %1463 = vmatprep.subr.mxu0 0.0
          %1464 = vmatpush1.msra.mxu0 %v718
          %1465 = vmatprep.subr.mxu0 0.0
          %1466 = vmatpush1.msra.mxu0 %v719
          %1467 = vmatprep.subr.mxu0 0.0
          %1468 = vmatpush1.msra.mxu0 0.0
          %1469 = vmatprep.subr.mxu0 0.0
          %1470 = vmatpush1.msra.mxu0 0.0
          %1471 = vmatprep.subr.mxu0 0.0
          %1472 = vmatpush1.msra.mxu0 0.0
          %1473 = vmatprep.subr.mxu0 0.0
          %1474 = vmatpush1.msra.mxu0 0.0
          %1475 = vmatprep.subr.mxu0 0.0
          %1476 = vmatpush1.msra.mxu0 0.0
          %1477 = vmatprep.subr.mxu0 0.0
          %1478 = vmatpush1.msra.mxu0 0.0
          %1479 = vmatprep.subr.mxu0 0.0
          %1480 = vmatpush1.msra.mxu0 0.0
          %1481 = vmatprep.subr.mxu0 0.0
          %1482 = vmatpush1.msra.mxu0 0.0
          %1483 = vmatprep.subr.mxu0 0.0
          %1484 = vmatpush1.msra.mxu0 0.0
          %1485 = vmatprep.subr.mxu0 0.0
          %1486 = vmatpush1.msra.mxu0 0.0
          %1487 = vmatprep.subr.mxu0 0.0
          %1488 = vmatpush1.msra.mxu0 0.0
          %1489 = vmatprep.subr.mxu0 0.0
          %1490 = vmatpush1.msra.mxu0 0.0
          %1491 = vmatprep.subr.mxu0 0.0
          %1492 = vmatpush1.msra.mxu0 0.0
          %1493 = vmatprep.subr.mxu0 0.0
          %1494 = vmatpush1.msra.mxu0 0.0
          %1495 = vmatprep.subr.mxu0 0.0
          %1496 = vmatpush1.msra.mxu0 0.0
          %1497 = vmatprep.subr.mxu0 0.0
          %1498 = vmatpush1.msra.mxu0 0.0
          %1499 = vmatprep.subr.mxu0 0.0
          %1500 = vmatpush1.msra.mxu0 0.0
          %1501 = vmatprep.subr.mxu0 0.0
          %1502 = vmatpush1.msra.mxu0 0.0
          %1503 = vmatprep.subr.mxu0 0.0
          %1504 = vmatpush1.msra.mxu0 0.0
          %1505 = vmatprep.subr.mxu0 0.0
          %1506 = vmatpush1.msra.mxu0 0.0
          %1507 = vmatprep.subr.mxu0 0.0
          %1508 = vmatpush1.msra.mxu0 0.0
          %1509 = vmatprep.subr.mxu0 0.0
          %1510 = vmatpush1.msra.mxu0 0.0
          %1511 = vmatprep.subr.mxu0 0.0
          %1512 = vmatpush1.msra.mxu0 0.0
          %1513 = vmatprep.subr.mxu0 0.0
          %1514 = vmatpush1.msra.mxu0 0.0
          %1515 = vmatprep.subr.mxu0 0.0
          %1516 = vmatpush1.msra.mxu0 0.0
          %1517 = vmatprep.subr.mxu0 0.0
          %1518 = vmatpush1.msra.mxu0 0.0
          %1519 = vmatprep.subr.mxu0 0.0
          %1520 = vmatpush1.msra.mxu0 0.0
          %1521 = vmatprep.subr.mxu0 0.0
          %1522 = vmatpush1.msra.mxu0 0.0
          %1523 = vmatprep.subr.mxu0 0.0
          %1524 = vmatpush1.msra.mxu0 0.0
          %1525 = vmatprep.subr.mxu0 0.0
          %1526 = vmatpush1.msra.mxu0 0.0
          %1527 = vmatprep.mubr.f32.mxu0 0.0
          %1528 = vmatmul.mubr.f32.gmra.mrb[0].mxu0 %v1458
          %v1529 = vpop.f32.mrb[0].mxu0
          %v1530 = vadd.f32 0.0, %v1529
          %v1531 = vpop.f32.mrb[0].mxu0
          %1532 = vmatprep.mubr.f32.mxu0 0.0
          %1533 = vmatmul.mubr.f32.gmra.mrb[0].mxu0 %v1461
          %v1534 = vpop.f32.mrb[0].mxu0
          %v1535 = vadd.f32 0.0, %v1534
          %v1536 = vpop.f32.mrb[0].mxu0
          %1537 = vdwg.mxu0
          %v1538 = vsub.f32 %v1362, %v1530
          %v1539 = vsub.f32 %v1367, %v1535
          %v1540 = vadd.f32 %v1453, %v1538
          %v1541 = vadd.f32 %v1454, %v1539
          %1542 = vmatprep.subr.mxu0 0.0
          %1543 = vmatpush1.msra.mxu0 %v1540
          %1544 = vmatprep.subr.mxu0 0.0
          %1545 = vmatpush1.msra.mxu0 %v1541
          %1546 = vmatprep.subr.mxu0 0.0
          %1547 = vmatpush1.msra.mxu0 0.0
          %1548 = vmatprep.subr.mxu0 0.0
          %1549 = vmatpush1.msra.mxu0 0.0
          %1550 = vmatprep.subr.mxu0 0.0
          %1551 = vmatpush1.msra.mxu0 0.0
          %1552 = vmatprep.subr.mxu0 0.0
          %1553 = vmatpush1.msra.mxu0 0.0
          %1554 = vmatprep.subr.mxu0 0.0
          %1555 = vmatpush1.msra.mxu0 0.0
          %1556 = vmatprep.subr.mxu0 0.0
          %1557 = vmatpush1.msra.mxu0 0.0
          %1558 = vmatprep.subr.mxu0 0.0
          %1559 = vmatpush1.msra.mxu0 0.0
          %1560 = vmatprep.subr.mxu0 0.0
          %1561 = vmatpush1.msra.mxu0 0.0
          %1562 = vmatprep.subr.mxu0 0.0
          %1563 = vmatpush1.msra.mxu0 0.0
          %1564 = vmatprep.subr.mxu0 0.0
          %1565 = vmatpush1.msra.mxu0 0.0
          %1566 = vmatprep.subr.mxu0 0.0
          %1567 = vmatpush1.msra.mxu0 0.0
          %1568 = vmatprep.subr.mxu0 0.0
          %1569 = vmatpush1.msra.mxu0 0.0
          %1570 = vmatprep.subr.mxu0 0.0
          %1571 = vmatpush1.msra.mxu0 0.0
          %1572 = vmatprep.subr.mxu0 0.0
          %1573 = vmatpush1.msra.mxu0 0.0
          %1574 = vmatprep.subr.mxu0 0.0
          %1575 = vmatpush1.msra.mxu0 0.0
          %1576 = vmatprep.subr.mxu0 0.0
          %1577 = vmatpush1.msra.mxu0 0.0
          %1578 = vmatprep.subr.mxu0 0.0
          %1579 = vmatpush1.msra.mxu0 0.0
          %1580 = vmatprep.subr.mxu0 0.0
          %1581 = vmatpush1.msra.mxu0 0.0
          %1582 = vmatprep.subr.mxu0 0.0
          %1583 = vmatpush1.msra.mxu0 0.0
          %1584 = vmatprep.subr.mxu0 0.0
          %1585 = vmatpush1.msra.mxu0 0.0
          %1586 = vmatprep.subr.mxu0 0.0
          %1587 = vmatpush1.msra.mxu0 0.0
          %1588 = vmatprep.subr.mxu0 0.0
          %1589 = vmatpush1.msra.mxu0 0.0
          %1590 = vmatprep.subr.mxu0 0.0
          %1591 = vmatpush1.msra.mxu0 0.0
          %1592 = vmatprep.subr.mxu0 0.0
          %1593 = vmatpush1.msra.mxu0 0.0
          %1594 = vmatprep.subr.mxu0 0.0
          %1595 = vmatpush1.msra.mxu0 0.0
          %1596 = vmatprep.subr.mxu0 0.0
          %1597 = vmatpush1.msra.mxu0 0.0
          %1598 = vmatprep.subr.mxu0 0.0
          %1599 = vmatpush1.msra.mxu0 0.0
          %1600 = vmatprep.subr.mxu0 0.0
          %1601 = vmatpush1.msra.mxu0 0.0
          %1602 = vmatprep.subr.mxu0 0.0
          %1603 = vmatpush1.msra.mxu0 0.0
          %1604 = vmatprep.subr.mxu0 0.0
          %1605 = vmatpush1.msra.mxu0 0.0
          %1606 = vmatprep.mubr.f32.mxu0 0.0
          %1607 = vmatmul.mubr.f32.gmra.mrb[0].mxu0 %v1025
          %v1608 = vpop.f32.mrb[0].mxu0
          %v1609 = vadd.f32 0.0, %v1608
          %v1610 = vpop.f32.mrb[0].mxu0
          %1611 = vmatprep.mubr.f32.mxu0 0.0
          %1612 = vmatmul.mubr.f32.gmra.mrb[0].mxu0 %v1028
          %v1613 = vpop.f32.mrb[0].mxu0
          %v1614 = vadd.f32 0.0, %v1613
          %v1615 = vpop.f32.mrb[0].mxu0
          %1616 = vdwg.mxu0
          %1617 = vmatprep.subr.mxu0 0.0
          %1618 = vmatpush1.msra.mxu0 %v1538
          %1619 = vmatprep.subr.mxu0 0.0
          %1620 = vmatpush1.msra.mxu0 %v1539
          %1621 = vmatprep.subr.mxu0 0.0
          %1622 = vmatpush1.msra.mxu0 0.0
          %1623 = vmatprep.subr.mxu0 0.0
          %1624 = vmatpush1.msra.mxu0 0.0
          %1625 = vmatprep.subr.mxu0 0.0
          %1626 = vmatpush1.msra.mxu0 0.0
          %1627 = vmatprep.subr.mxu0 0.0
          %1628 = vmatpush1.msra.mxu0 0.0
          %1629 = vmatprep.subr.mxu0 0.0
          %1630 = vmatpush1.msra.mxu0 0.0
          %1631 = vmatprep.subr.mxu0 0.0
          %1632 = vmatpush1.msra.mxu0 0.0
          %1633 = vmatprep.subr.mxu0 0.0
          %1634 = vmatpush1.msra.mxu0 0.0
          %1635 = vmatprep.subr.mxu0 0.0
          %1636 = vmatpush1.msra.mxu0 0.0
          %1637 = vmatprep.subr.mxu0 0.0
          %1638 = vmatpush1.msra.mxu0 0.0
          %1639 = vmatprep.subr.mxu0 0.0
          %1640 = vmatpush1.msra.mxu0 0.0
          %1641 = vmatprep.subr.mxu0 0.0
          %1642 = vmatpush1.msra.mxu0 0.0
          %1643 = vmatprep.subr.mxu0 0.0
          %1644 = vmatpush1.msra.mxu0 0.0
          %1645 = vmatprep.subr.mxu0 0.0
          %1646 = vmatpush1.msra.mxu0 0.0
          %1647 = vmatprep.subr.mxu0 0.0
          %1648 = vmatpush1.msra.mxu0 0.0
          %1649 = vmatprep.subr.mxu0 0.0
          %1650 = vmatpush1.msra.mxu0 0.0
          %1651 = vmatprep.subr.mxu0 0.0
          %1652 = vmatpush1.msra.mxu0 0.0
          %1653 = vmatprep.subr.mxu0 0.0
          %1654 = vmatpush1.msra.mxu0 0.0
          %1655 = vmatprep.subr.mxu0 0.0
          %1656 = vmatpush1.msra.mxu0 0.0
          %1657 = vmatprep.subr.mxu0 0.0
          %1658 = vmatpush1.msra.mxu0 0.0
          %1659 = vmatprep.subr.mxu0 0.0
          %1660 = vmatpush1.msra.mxu0 0.0
          %1661 = vmatprep.subr.mxu0 0.0
          %1662 = vmatpush1.msra.mxu0 0.0
          %1663 = vmatprep.subr.mxu0 0.0
          %1664 = vmatpush1.msra.mxu0 0.0
          %1665 = vmatprep.subr.mxu0 0.0
          %1666 = vmatpush1.msra.mxu0 0.0
          %1667 = vmatprep.subr.mxu0 0.0
          %1668 = vmatpush1.msra.mxu0 0.0
          %1669 = vmatprep.subr.mxu0 0.0
          %1670 = vmatpush1.msra.mxu0 0.0
          %1671 = vmatprep.subr.mxu0 0.0
          %1672 = vmatpush1.msra.mxu0 0.0
          %1673 = vmatprep.subr.mxu0 0.0
          %1674 = vmatpush1.msra.mxu0 0.0
          %1675 = vmatprep.subr.mxu0 0.0
          %1676 = vmatpush1.msra.mxu0 0.0
          %1677 = vmatprep.subr.mxu0 0.0
          %1678 = vmatpush1.msra.mxu0 0.0
          %1679 = vmatprep.subr.mxu0 0.0
          %1680 = vmatpush1.msra.mxu0 0.0
          %1681 = vmatprep.mubr.f32.mxu0 0.0
          %1682 = vmatmul.mubr.f32.gmra.mrb[0].mxu0 %v1106
          %v1683 = vpop.f32.mrb[0].mxu0
          %v1684 = vadd.f32 0.0, %v1683
          %v1685 = vpop.f32.mrb[0].mxu0
          %1686 = vmatprep.mubr.f32.mxu0 0.0
          %1687 = vmatmul.mubr.f32.gmra.mrb[0].mxu0 %v1109
          %v1688 = vpop.f32.mrb[0].mxu0
          %v1689 = vadd.f32 0.0, %v1688
          %v1690 = vpop.f32.mrb[0].mxu0
          %1691 = vdwg.mxu0
          %v1692 = vsub.f32 %v1609, %v1684
          %v1693 = vsub.f32 %v1614, %v1689
          %1694 = vmatprep.subr.mxu0 0.0
          %1695 = vmatpush1.msra.mxu0 %v1453
          %1696 = vmatprep.subr.mxu0 0.0
          %1697 = vmatpush1.msra.mxu0 %v1454
          %1698 = vmatprep.subr.mxu0 0.0
          %1699 = vmatpush1.msra.mxu0 0.0
          %1700 = vmatprep.subr.mxu0 0.0
          %1701 = vmatpush1.msra.mxu0 0.0
          %1702 = vmatprep.subr.mxu0 0.0
          %1703 = vmatpush1.msra.mxu0 0.0
          %1704 = vmatprep.subr.mxu0 0.0
          %1705 = vmatpush1.msra.mxu0 0.0
          %1706 = vmatprep.subr.mxu0 0.0
          %1707 = vmatpush1.msra.mxu0 0.0
          %1708 = vmatprep.subr.mxu0 0.0
          %1709 = vmatpush1.msra.mxu0 0.0
          %1710 = vmatprep.subr.mxu0 0.0
          %1711 = vmatpush1.msra.mxu0 0.0
          %1712 = vmatprep.subr.mxu0 0.0
          %1713 = vmatpush1.msra.mxu0 0.0
          %1714 = vmatprep.subr.mxu0 0.0
          %1715 = vmatpush1.msra.mxu0 0.0
          %1716 = vmatprep.subr.mxu0 0.0
          %1717 = vmatpush1.msra.mxu0 0.0
          %1718 = vmatprep.subr.mxu0 0.0
          %1719 = vmatpush1.msra.mxu0 0.0
          %1720 = vmatprep.subr.mxu0 0.0
          %1721 = vmatpush1.msra.mxu0 0.0
          %1722 = vmatprep.subr.mxu0 0.0
          %1723 = vmatpush1.msra.mxu0 0.0
          %1724 = vmatprep.subr.mxu0 0.0
          %1725 = vmatpush1.msra.mxu0 0.0
          %1726 = vmatprep.subr.mxu0 0.0
          %1727 = vmatpush1.msra.mxu0 0.0
          %1728 = vmatprep.subr.mxu0 0.0
          %1729 = vmatpush1.msra.mxu0 0.0
          %1730 = vmatprep.subr.mxu0 0.0
          %1731 = vmatpush1.msra.mxu0 0.0
          %1732 = vmatprep.subr.mxu0 0.0
          %1733 = vmatpush1.msra.mxu0 0.0
          %1734 = vmatprep.subr.mxu0 0.0
          %1735 = vmatpush1.msra.mxu0 0.0
          %1736 = vmatprep.subr.mxu0 0.0
          %1737 = vmatpush1.msra.mxu0 0.0
          %1738 = vmatprep.subr.mxu0 0.0
          %1739 = vmatpush1.msra.mxu0 0.0
          %1740 = vmatprep.subr.mxu0 0.0
          %1741 = vmatpush1.msra.mxu0 0.0
          %1742 = vmatprep.subr.mxu0 0.0
          %1743 = vmatpush1.msra.mxu0 0.0
          %1744 = vmatprep.subr.mxu0 0.0
          %1745 = vmatpush1.msra.mxu0 0.0
          %1746 = vmatprep.subr.mxu0 0.0
          %1747 = vmatpush1.msra.mxu0 0.0
          %1748 = vmatprep.subr.mxu0 0.0
          %1749 = vmatpush1.msra.mxu0 0.0
          %1750 = vmatprep.subr.mxu0 0.0
          %1751 = vmatpush1.msra.mxu0 0.0
          %1752 = vmatprep.subr.mxu0 0.0
          %1753 = vmatpush1.msra.mxu0 0.0
          %1754 = vmatprep.subr.mxu0 0.0
          %1755 = vmatpush1.msra.mxu0 0.0
          %1756 = vmatprep.subr.mxu0 0.0
          %1757 = vmatpush1.msra.mxu0 0.0
          %1758 = vmatprep.mubr.f32.mxu0 0.0
          %1759 = vmatmul.mubr.f32.gmra.mrb[0].mxu0 %v1189
          %v1760 = vpop.f32.mrb[0].mxu0
          %v1761 = vadd.f32 0.0, %v1760
          %v1762 = vpop.f32.mrb[0].mxu0
          %1763 = vmatprep.mubr.f32.mxu0 0.0
          %1764 = vmatmul.mubr.f32.gmra.mrb[0].mxu0 %v1192
          %v1765 = vpop.f32.mrb[0].mxu0
          %v1766 = vadd.f32 0.0, %v1765
          %v1767 = vpop.f32.mrb[0].mxu0
          %1768 = vdwg.mxu0
          %v1769 = vadd.f32 %v1609, %v1761
          %v1770 = vadd.f32 %v1614, %v1766
          %v1771 = vsub.f32 %v1692, %v761
          %v1772 = vsub.f32 %v1693, %v761
          %v1774 = vlaneseq
          %v1775 = vshrl.u32 %v1774, 7
          %v1776 = vsub.s32 0, %v1775
          %v1777 = vrot.slane %v738, %v1776
          %1778 = vset.pattern.permute.xlu0 0
          %1779 = vperm.xlu0 %1778, %v1777
          %v1780 = vpop.permute.xlu0 %1779
          %v1782 = vmul.f32 %v1771, %v1780
          %v1783 = vmul.f32 %v1772, %v1780
          %s1784 = scalar_lea.vmem %s688, %s739 [#allocation14]
          %1785 = vst.msk [vmem:[%s1784] sm:$0xff] %vm770, %v1782
          %1786 = vst.msk [vmem:[%s1784 + $0x8] sm:$0xff] %vm770, %v1783
          %v1787 = vsub.f32 0.0, %v738
          %v1789 = vlaneseq
          %v1790 = vshrl.u32 %v1789, 7
          %v1791 = vsub.s32 0, %v1790
          %v1792 = vrot.slane %v1787, %v1791
          %1793 = vset.pattern.permute.xlu0 0
          %1794 = vperm.xlu0 %1793, %v1792
          %v1795 = vpop.permute.xlu0 %1794
          %v1797 = vmul.f32 %v1769, %v1795
          %v1798 = vmul.f32 %v1770, %v1795
          %s1799 = scalar_lea.vmem %s695, %s739 [#allocation15]
          %1800 = vst.msk [vmem:[%s1799] sm:$0xff] %vm770, %v1797
          %1801 = vst.msk [vmem:[%s1799 + $0x8] sm:$0xff] %vm770, %v1798
        $region109: #{tpu_custom_call.1} parent=71 // loop_footer
          %s731 = sadd.s32 1, %s727
        $region110: #{tpu_custom_call.1} parent=71 // loop_footer_branch
          %726 = sbr.rel target = $region106
        $region111: #{tpu_custom_call.1} parent=71 // loop_exit
          _
        %s1802 = sand.u32 %s346, 1
        %s1803 = scalar_lea.sflag [#allocation4], %s1802
        %s1804 = sand.u32 %s346, 1
        %s1805 = smul.addr %s1804, 64
        %s1806 = scalar_lea.vmem [#allocation14], %s1805
        %s1807 = sand.u32 %s372, 1
        %s1808 = scalar_lea.sflag [#allocation16], %s1807
        %s1809 = sand.u32 %s372, 1
        %s1810 = smul.addr %s1809, 64
        %s1811 = scalar_lea.vmem [#allocation15], %s1810
        // Predicated region
        $region112: #{tpu_custom_call.1} parent=71 // pred_check
          %p1812 = pneg %p356
        $region113: #{tpu_custom_call.1} parent=71 // pred_check_branch
          %1814 = sbr.rel (%p1812) target = $region115
        $region114: #{tpu_custom_call.1} parent=71 // pred_region
          %s1815 = smul.u32 4, %s35
          %s1817 = ssub.s32 1024, 1024
          %1818 = vsyncadd %s1803, %s1817
          %s1819 = smul.addr %s1815, 2
          %s1820 = smul.addr %s1819, 128
          %s1821 = scalar_lea.hbm %s13, %s1820
          %s1822 = sshll.u32 %s1806, 4
          %s1823 = int_to_ptr.vmem [resolvable:$true] %s1822
          %1828 = dma.vmem_to_hbm [thread:$0]  %s1823, 1024, %s1821, %s1803, 128, 128, 8
        $region115: #{tpu_custom_call.1} parent=71 // pred_fallthru
          _
        // Predicated region
        $region116: #{tpu_custom_call.1} parent=71 // pred_check
          %p1829 = pneg %p382
        $region117: #{tpu_custom_call.1} parent=71 // pred_check_branch
          %1831 = sbr.rel (%p1829) target = $region119
        $region118: #{tpu_custom_call.1} parent=71 // pred_region
          %s1832 = smul.u32 4, %s35
          %s1834 = ssub.s32 1024, 1024
          %1835 = vsyncadd %s1808, %s1834
          %s1836 = smul.addr %s1832, 2
          %s1837 = smul.addr %s1836, 128
          %s1838 = scalar_lea.hbm %s14, %s1837
          %s1839 = sshll.u32 %s1811, 4
          %s1840 = int_to_ptr.vmem [resolvable:$true] %s1839
          %1845 = dma.vmem_to_hbm [thread:$0]  %s1840, 1024, %s1838, %s1808, 128, 128, 8
        $region119: #{tpu_custom_call.1} parent=71 // pred_fallthru
          _
      $region72: #{tpu_custom_call.1} parent=5 // pred_fallthru
        _
      %p1846 = scmp.le.s32.totalorder 2, %s30
      // Predicated region
      $region120: #{tpu_custom_call.1} parent=5 // pred_check
        %p1847 = pneg %p1846
      $region121: #{tpu_custom_call.1} parent=5 // pred_check_branch
        %1849 = sbr.rel (%p1847) target = $region123
      $region122: #{tpu_custom_call.1} parent=5 // pred_region
        %s1850 = ssub.s32 %s30, 2
        // Predicated region
        $region124: #{tpu_custom_call.1} parent=122 // pred_check
          %p1851 = pneg %p362
        $region125: #{tpu_custom_call.1} parent=122 // pred_check_branch
          %1853 = sbr.rel (%p1851) target = $region127
        $region126: #{tpu_custom_call.1} parent=122 // pred_region
          %s1854 = sand.u32 %s347, 1
          %s1855 = scalar_lea.sflag [#allocation4], %s1854
          %s1856 = sand.u32 %s347, 1
          %s1857 = smul.addr %s1856, 64
          %s1858 = scalar_lea.vmem [#allocation14], %s1857
          %1859 = dma.done %s1855, 1024
        $region127: #{tpu_custom_call.1} parent=122 // pred_fallthru
          _
        // Predicated region
        $region128: #{tpu_custom_call.1} parent=122 // pred_check
          %p1860 = pneg %p388
        $region129: #{tpu_custom_call.1} parent=122 // pred_check_branch
          %1862 = sbr.rel (%p1860) target = $region131
        $region130: #{tpu_custom_call.1} parent=122 // pred_region
          %s1863 = sand.u32 %s373, 1
          %s1864 = scalar_lea.sflag [#allocation16], %s1863
          %s1865 = sand.u32 %s373, 1
          %s1866 = smul.addr %s1865, 64
          %s1867 = scalar_lea.vmem [#allocation15], %s1866
          %1868 = dma.done %s1864, 1024
        $region131: #{tpu_custom_call.1} parent=122 // pred_fallthru
          _
      $region123: #{tpu_custom_call.1} parent=5 // pred_fallthru
        _
    $region6: #{tpu_custom_call.1} parent=1 // loop_footer
      %s34 = sadd.s32 1, %s30
    $region7: #{tpu_custom_call.1} parent=1 // loop_footer_branch
      %29 = sbr.rel target = $region3
    $region8: #{tpu_custom_call.1} parent=1 // loop_exit
      _
    %1869 = vsyncpa [#allocation3], 1
    %s1870 = scalar_lea.sflag [#allocation3], 1
    %1871 = vsyncpa %s1870, 1
    %1872 = vsyncpa [#allocation6], 1
    %1873 = vsyncpa [#allocation9], 1
    %1874 = vsyncpa [#allocation4], 1
    %s1875 = scalar_lea.sflag [#allocation4], 1
    %1876 = vsyncpa %s1875, 1
    %1877 = vsyncpa [#allocation16], 1
    %s1878 = scalar_lea.sflag [#allocation16], 1
    %1879 = vsyncpa %s1878, 1

</llo_original>
